<compile_context>
chip_gen: v6e
topology: v6e:2x2x1
jax: 0.10.0
libtpu: 0.0.40
codegen_flags: <defaults>
</compile_context>

<pallas_src>
import jax
import jax.numpy as jnp
from jax.experimental import pallas as pl
from jax.experimental.pallas import tpu as pltpu

_HI = jax.lax.Precision.HIGHEST


# -----------------------------------------------------------------------------
# Fused Pallas kernel:  out = (ELU(ELU(z@A1+c1)@A2+c2))@A3 + c3
# -----------------------------------------------------------------------------
def _fused_decoder_kernel(z_ref, a1_ref, c1_ref, a2_ref, c2_ref,
                          a3_ref, c3_ref, o_ref):
    def elu(v):
        # torch ELU(alpha=1). exp(min(v,0))-1 is used (guaranteed Mosaic
        # lowering); the precision delta vs expm1 is <= f32 eps here.
        # TODO(synk): switch to jnp.expm1 once confirmed in the Mosaic lowering set.
        return jnp.where(v > 0.0, v, jnp.exp(jnp.minimum(v, 0.0)) - 1.0)

    h = jnp.dot(z_ref[...], a1_ref[...], preferred_element_type=jnp.float32)
    h = elu(h + c1_ref[...])                                   # (bm, 256)
    h = jnp.dot(h, a2_ref[...], preferred_element_type=jnp.float32)
    h = elu(h + c2_ref[...])                                   # (bm, 1024)
    h = jnp.dot(h, a3_ref[...], preferred_element_type=jnp.float32)
    o_ref[...] = (h + c3_ref[...]).astype(o_ref.dtype)         # (bm, H*W)


def eegnet_decoder_forward(folded, z, *, block_m=128):
    """z: (B, hidden) -> (B, 1, H_out, W_out), single fused pallas_call."""
    hidden, n1, n2, n3, h_out, w_out = folded["dims"]
    B = z.shape[0]
    z = jnp.asarray(z, jnp.float32)

    bm = B if B <= block_m else block_m
    pad = (-B) % bm
    if pad:
        z = jnp.pad(z, ((0, pad), (0, 0)))
    Bp = z.shape[0]
    grid = (Bp // bm,)

    flops = 2 * Bp * (hidden * n1 + n1 * n2 + n2 * n3)
    transcendentals = Bp * (n1 + n2)
    bytes_accessed = 4 * (Bp * hidden + hidden * n1 + n1 + n1 * n2 + n2
                          + n2 * n3 + n3 + Bp * n3)

    out = pl.pallas_call(
        _fused_decoder_kernel,
        out_shape=jax.ShapeDtypeStruct((Bp, n3), jnp.float32),
        grid=grid,
        in_specs=[
            pl.BlockSpec((bm, hidden), lambda i: (i, 0)),   # z rows
            pl.BlockSpec((hidden, n1), lambda i: (0, 0)),   # A1
            pl.BlockSpec((1, n1),      lambda i: (0, 0)),   # c1
            pl.BlockSpec((n1, n2),     lambda i: (0, 0)),   # A2
            pl.BlockSpec((1, n2),      lambda i: (0, 0)),   # c2
            pl.BlockSpec((n2, n3),     lambda i: (0, 0)),   # A3
            pl.BlockSpec((1, n3),      lambda i: (0, 0)),   # c3
        ],
        out_specs=pl.BlockSpec((bm, n3), lambda i: (i, 0)),
        compiler_params=pltpu.CompilerParams(
            dimension_semantics=("parallel",)),
        cost_estimate=pl.CostEstimate(
            flops=flops, transcendentals=transcendentals,
            bytes_accessed=bytes_accessed),
    )(z, folded["a1"], folded["c1"], folded["a2"], folded["c2"],
      folded["a3"], folded["c3"])

    return out[:B].reshape(B, 1, h_out, w_out)


# -----------------------------------------------------------------------------
# Raw (PyTorch-layout) parameters — same construction as the original version
# -----------------------------------------------------------------------------
def init_decoder_params(key, hidden_dim, conv_shape, c_original):
    _, F2, Cr, Tr = conv_shape
    flatten_dim = F2 * Cr * Tr
    ks = jax.random.split(key, 8)
    s = 0.1
    return {
        # nn.Linear(hidden_dim, flatten_dim): weight (out, in), bias (out,)
        "fc_w": s * jax.random.normal(ks[0], (flatten_dim, hidden_dim), jnp.float32),
        "fc_b": s * jax.random.normal(ks[1], (flatten_dim,), jnp.float32),
        # ConvTranspose2d(F2 -> F2//2, kernel (1,4), stride (1,4)); weight (Cin,Cout,1,4)
        "w1": s * jax.random.normal(ks[2], (F2, F2 // 2, 1, 4), jnp.float32),
        "b1": s * jax.random.normal(ks[3], (F2 // 2,), jnp.float32),
        # ConvTranspose2d(F2//2 -> F2//2, kernel (C,1)); weight (Cin,Cout,C,1)
        "w2": s * jax.random.normal(ks[4], (F2 // 2, F2 // 2, c_original, 1), jnp.float32),
        "b2": s * jax.random.normal(ks[5], (F2 // 2,), jnp.float32),
        # ConvTranspose2d(F2//2 -> 1, kernel (1,4), stride 1); weight (Cin,1,1,4)
        "w3": s * jax.random.normal(ks[6], (F2 // 2, 1, 1, 4), jnp.float32),
        "b3": s * jax.random.normal(ks[7], (1,), jnp.float32),
    }


# -----------------------------------------------------------------------------
# One-time weight folding (plain JAX, exact) into the 3-GEMM form
# -----------------------------------------------------------------------------
def fold_decoder_params(raw, conv_shape, shape_original_input):
    _, F2, Cr, Tr = conv_shape
    assert Cr == 1, "EEGNet encoder collapses EEG channels to height 1"
    hidden = raw["fc_w"].shape[1]
    Co1, kT1 = raw["w1"].shape[1], raw["w1"].shape[3]
    Co2, C = raw["w2"].shape[1], raw["w2"].shape[2]
    kT3 = raw["w3"].shape[3]
    T1 = Tr * kT1                       # time length after stage 1
    T3 = T1 + kT3 - 1                   # time length after stage 3
    H_out, W_out = shape_original_input
    f32 = jnp.float32

    fcw_r = raw["fc_w"].T.astype(f32).reshape(hidden, F2, Tr)   # (k, c, t)
    fcb_r = raw["fc_b"].astype(f32).reshape(F2, Tr)
    w1r = raw["w1"][:, :, 0, :].astype(f32)                     # (F2, Co1, kT1)
    w2r = raw["w2"][:, :, :, 0].astype(f32)                     # (Co1, Co2, C)
    w3r = raw["w3"][:, 0, 0, :].astype(f32)                     # (Co2, kT3)

    # --- fc  ∘  ConvTranspose2d(F2->Co1,(1,4),stride(1,4)) : hidden -> Co1*T1
    # stage-1 output flat order (co1, t1), t1 = tc*kT1 + j  (NCHW flatten, H=1)
    a1 = jnp.einsum('kct,coj->kotj', fcw_r, w1r,
                    precision=_HI).reshape(hidden, Co1 * T1)
    c1 = (jnp.einsum('ct,coj->otj', fcb_r, w1r,
                     precision=_HI).reshape(Co1 * T1)
          + jnp.repeat(raw["b1"].astype(f32), T1))

    # --- ConvTranspose2d(Co1->Co2,(C,1)) pointwise in time: Co1*T1 -> Co2*C*T1
    eye_t = jnp.eye(T1, dtype=f32)
    a2 = jnp.einsum('ioh,tu->itohu', w2r, eye_t,
                    precision=_HI).reshape(Co1 * T1, Co2 * C * T1)
    c2 = jnp.repeat(raw["b2"].astype(f32), C * T1)

    # --- ConvTranspose2d(Co2->1,(1,4),stride 1)  +  nn.Upsample(nearest)
    d = jnp.arange(T3)[None, :] - jnp.arange(T1)[:, None]       # t3 - t2
    taps = (d[None, :, :] == jnp.arange(kT3)[:, None, None]).astype(f32)
    k3 = jnp.einsum('cj,jtu->ctu', w3r, taps, precision=_HI)    # (Co2, T1, T3)
    m3 = jnp.einsum('ctu,hg->chtgu', k3, jnp.eye(C, dtype=f32),
                    precision=_HI).reshape(Co2 * C * T1, C, T3)
    h_idx = (jnp.arange(H_out) * C) // H_out                    # identity when C==H_out
    w_idx = (jnp.arange(W_out) * T3) // W_out                   # nearest (torch formula)
    a3 = m3[:, h_idx, :][:, :, w_idx].reshape(Co2 * C * T1, H_out * W_out)
    c3 = jnp.full((H_out * W_out,), raw["b3"][0], dtype=f32)

    return {
        "a1": a1, "c1": c1.reshape(1, -1),
        "a2": a2, "c2": c2.reshape(1, -1),
        "a3": a3, "c3": c3.reshape(1, -1),
        "dims": (hidden, Co1 * T1, Co2 * C * T1, H_out * W_out, H_out, W_out),
    }


# -----------------------------------------------------------------------------
# Plain-JAX (un-fused, un-folded) reference mirroring the PyTorch module
# -----------------------------------------------------------------------------
def reference_forward(raw, z, conv_shape, shape_original_input):
    B = z.shape[0]
    _, F2, Cr, Tr = conv_shape
    assert Cr == 1
    elu = lambda v: jnp.where(v > 0.0, v, jnp.expm1(v))

    # fc_decoder (nn.Linear): y = z @ W.T + b ; reshape to conv_shape (NCHW)
    f = jnp.einsum('bk,nk->bn', z, raw["fc_w"], precision=_HI) + raw["fc_b"]
    x = f.reshape(B, F2, Cr, Tr)

    # ConvTranspose2d(F2 -> Co1, (1,4), stride (1,4)) + ELU
    w1 = raw["w1"]; Co1, kT1 = w1.shape[1], w1.shape[3]
    y1 = jnp.einsum('bct,coj->botj', x[:, :, 0, :], w1[:, :, 0, :], precision=_HI)
    y1 = y1.reshape(B, Co1, 1, Tr * kT1) + raw["b1"].reshape(1, Co1, 1, 1)
    x = elu(y1)

    # ConvTranspose2d(Co1 -> Co2, (C,1)) + ELU  (height 1 -> C)
    w2 = raw["w2"]; Co2, C = w2.shape[1], w2.shape[2]
    T1 = x.shape[3]
    y2 = jnp.einsum('bit,ioh->boht', x[:, :, 0, :], w2[:, :, :, 0], precision=_HI)
    x = elu(y2 + raw["b2"].reshape(1, Co2, 1, 1))

    # ConvTranspose2d(Co2 -> 1, (1,4), stride 1)
    w3 = raw["w3"]; kT3 = w3.shape[3]
    T3 = T1 + kT3 - 1
    y3 = jnp.zeros((B, 1, C, T3), jnp.float32)
    for j in range(kT3):
        y3 = y3.at[:, 0, :, j:j + T1].add(
            jnp.einsum('biht,i->bht', x, w3[:, 0, 0, j], precision=_HI))
    y3 = y3 + raw["b3"].reshape(1, 1, 1, 1)

    # nn.Upsample(size=shape_original_input), mode='nearest'
    H_out, W_out = shape_original_input
    H_in, W_in = y3.shape[2], y3.shape[3]
    h_idx = (jnp.arange(H_out) * H_in) // H_out
    w_idx = (jnp.arange(W_out) * W_in) // W_out
    return y3[:, :, h_idx, :][:, :, :, w_idx]


# -----------------------------------------------------------------------------
if __name__ == "__main__":
    key = jax.random.PRNGKey(0)
    kp, kz = jax.random.split(key)

    B = 2
    hidden_space_dimension = 32
    conv_shape = (1, 16, 1, 8)        # (N, F2, C_reduced, T_reduced) at encoder output
    shape_original_input = (4, 40)    # (C, T) of the original EEG window

    raw = init_decoder_params(kp, hidden_space_dimension, conv_shape,
                              shape_original_input[0])
    folded = fold_decoder_params(raw, conv_shape, shape_original_input)
    z = jax.random.normal(kz, (B, hidden_space_dimension), jnp.float32)

    out = eegnet_decoder_forward(folded, z)
    out = jax.block_until_ready(out)

    ref = jax.block_until_ready(
        reference_forward(raw, z, conv_shape, shape_original_input))

    assert out.shape == (B, 1, *shape_original_input), out.shape
    assert out.dtype == jnp.float32
    assert bool(jnp.all(jnp.isfinite(out)))
    err = float(jnp.max(jnp.abs(out - ref)))
    assert err < 1e-2, f"mismatch vs plain-JAX reference: max abs err {err}"
    print("KERNEL_OK")
</pallas_src>

<mosaic_0001>
module attributes {stable_mosaic.version = 11 : i64} {
  func.func @_fused_decoder_kernel(%arg0: i32, %arg1: memref<2x32xf32, #tpu.memory_space<vmem>>, %arg2: memref<32x256xf32, #tpu.memory_space<vmem>>, %arg3: memref<1x256xf32, #tpu.memory_space<vmem>>, %arg4: memref<256x1024xf32, #tpu.memory_space<vmem>>, %arg5: memref<1x1024xf32, #tpu.memory_space<vmem>>, %arg6: memref<1024x160xf32, #tpu.memory_space<vmem>>, %arg7: memref<1x160xf32, #tpu.memory_space<vmem>>, %arg8: memref<2x160xf32, #tpu.memory_space<vmem>>) attributes {dimension_semantics = [#tpu.dimension_semantics<parallel>], iteration_bounds = array<i64: 1>, scalar_prefetch = 0 : i64, scratch_operands = 0 : i64, tpu.core_type = #tpu.core_type<tc>, window_params = [{transform_indices = @transform_0, window_bounds = array<i64: 2, 32>}, {pipeline_mode = #tpu.pipeline_mode<synchronous>, transform_indices = @transform_1, window_bounds = array<i64: 32, 256>}, {pipeline_mode = #tpu.pipeline_mode<synchronous>, transform_indices = @transform_2, window_bounds = array<i64: 1, 256>}, {pipeline_mode = #tpu.pipeline_mode<synchronous>, transform_indices = @transform_3, window_bounds = array<i64: 256, 1024>}, {pipeline_mode = #tpu.pipeline_mode<synchronous>, transform_indices = @transform_4, window_bounds = array<i64: 1, 1024>}, {pipeline_mode = #tpu.pipeline_mode<synchronous>, transform_indices = @transform_5, window_bounds = array<i64: 1024, 160>}, {pipeline_mode = #tpu.pipeline_mode<synchronous>, transform_indices = @transform_6, window_bounds = array<i64: 1, 160>}, {transform_indices = @transform_7, window_bounds = array<i64: 2, 160>}]} {
    %c0 = arith.constant 0 : index
    %c0_0 = arith.constant 0 : index
    %0 = vector.load %arg1[%c0, %c0_0] : memref<2x32xf32, #tpu.memory_space<vmem>>, vector<2x32xf32>
    %c0_1 = arith.constant 0 : index
    %c0_2 = arith.constant 0 : index
    %1 = vector.load %arg2[%c0_1, %c0_2] : memref<32x256xf32, #tpu.memory_space<vmem>>, vector<32x256xf32>
    %cst = arith.constant dense<0.000000e+00> : vector<2x256xf32>
    %2 = tpu.matmul %0, %1, %cst {dimension_numbers = #tpu.dot_dimension_numbers<[1], [0], [0], [1], [0, 0, 1, 1], [], []>} : vector<2x32xf32>, vector<32x256xf32>, vector<2x256xf32> -> vector<2x256xf32>
    %c0_3 = arith.constant 0 : index
    %c0_4 = arith.constant 0 : index
    %3 = vector.load %arg3[%c0_3, %c0_4] : memref<1x256xf32, #tpu.memory_space<vmem>>, vector<1x256xf32>
    %4 = vector.broadcast %3 : vector<1x256xf32> to vector<2x256xf32>
    %5 = arith.addf %2, %4 : vector<2x256xf32>
    %cst_5 = arith.constant 0.000000e+00 : f32
    %6 = vector.broadcast %cst_5 : f32 to vector<2x256xf32>
    %7 = arith.cmpf ogt, %5, %6 : vector<2x256xf32>
    %cst_6 = arith.constant 0.000000e+00 : f32
    %8 = vector.broadcast %cst_6 : f32 to vector<2x256xf32>
    %9 = arith.minimumf %5, %8 : vector<2x256xf32>
    %10 = math.exp %9 : vector<2x256xf32>
    %cst_7 = arith.constant 1.000000e+00 : f32
    %11 = vector.broadcast %cst_7 : f32 to vector<2x256xf32>
    %12 = arith.subf %10, %11 : vector<2x256xf32>
    %13 = arith.select %7, %5, %12 : vector<2x256xi1>, vector<2x256xf32>
    %c0_8 = arith.constant 0 : index
    %c0_9 = arith.constant 0 : index
    %14 = vector.load %arg4[%c0_8, %c0_9] : memref<256x1024xf32, #tpu.memory_space<vmem>>, vector<256x1024xf32>
    %cst_10 = arith.constant dense<0.000000e+00> : vector<2x1024xf32>
    %15 = tpu.matmul %13, %14, %cst_10 {dimension_numbers = #tpu.dot_dimension_numbers<[1], [0], [0], [1], [0, 0, 1, 1], [], []>} : vector<2x256xf32>, vector<256x1024xf32>, vector<2x1024xf32> -> vector<2x1024xf32>
    %c0_11 = arith.constant 0 : index
    %c0_12 = arith.constant 0 : index
    %16 = vector.load %arg5[%c0_11, %c0_12] : memref<1x1024xf32, #tpu.memory_space<vmem>>, vector<1x1024xf32>
    %17 = vector.broadcast %16 : vector<1x1024xf32> to vector<2x1024xf32>
    %18 = arith.addf %15, %17 : vector<2x1024xf32>
    %cst_13 = arith.constant 0.000000e+00 : f32
    %19 = vector.broadcast %cst_13 : f32 to vector<2x1024xf32>
    %20 = arith.cmpf ogt, %18, %19 : vector<2x1024xf32>
    %cst_14 = arith.constant 0.000000e+00 : f32
    %21 = vector.broadcast %cst_14 : f32 to vector<2x1024xf32>
    %22 = arith.minimumf %18, %21 : vector<2x1024xf32>
    %23 = math.exp %22 : vector<2x1024xf32>
    %cst_15 = arith.constant 1.000000e+00 : f32
    %24 = vector.broadcast %cst_15 : f32 to vector<2x1024xf32>
    %25 = arith.subf %23, %24 : vector<2x1024xf32>
    %26 = arith.select %20, %18, %25 : vector<2x1024xi1>, vector<2x1024xf32>
    %c0_16 = arith.constant 0 : index
    %c0_17 = arith.constant 0 : index
    %27 = vector.load %arg6[%c0_16, %c0_17] : memref<1024x160xf32, #tpu.memory_space<vmem>>, vector<1024x160xf32>
    %cst_18 = arith.constant dense<0.000000e+00> : vector<2x160xf32>
    %28 = tpu.matmul %26, %27, %cst_18 {dimension_numbers = #tpu.dot_dimension_numbers<[1], [0], [0], [1], [0, 0, 1, 1], [], []>} : vector<2x1024xf32>, vector<1024x160xf32>, vector<2x160xf32> -> vector<2x160xf32>
    %c0_19 = arith.constant 0 : index
    %c0_20 = arith.constant 0 : index
    %29 = vector.load %arg7[%c0_19, %c0_20] : memref<1x160xf32, #tpu.memory_space<vmem>>, vector<1x160xf32>
    %30 = vector.broadcast %29 : vector<1x160xf32> to vector<2x160xf32>
    %31 = arith.addf %28, %30 : vector<2x160xf32>
    %c0_21 = arith.constant 0 : index
    %c0_22 = arith.constant 0 : index
    %32 = vector.load %arg8[%c0_21, %c0_22] : memref<2x160xf32, #tpu.memory_space<vmem>>, vector<2x160xf32>
    tpu.vector_store %arg8[%c0_21, %c0_22], %31 {strides = array<i32>} : memref<2x160xf32, #tpu.memory_space<vmem>>, vector<2x160xf32>,
    return
  }
  func.func @transform_0(%arg0: i32) -> (i32, i32) {
    %c0_i32 = arith.constant 0 : i32
    %c0_i32_0 = arith.constant 0 : i32
    return %arg0, %c0_i32 : i32, i32
  }
  func.func @transform_1(%arg0: i32) -> (i32, i32) {
    %c0_i32 = arith.constant 0 : i32
    %c0_i32_0 = arith.constant 0 : i32
    %c0_i32_1 = arith.constant 0 : i32
    return %c0_i32, %c0_i32_0 : i32, i32
  }
  func.func @transform_2(%arg0: i32) -> (i32, i32) {
    %c0_i32 = arith.constant 0 : i32
    %c0_i32_0 = arith.constant 0 : i32
    %c0_i32_1 = arith.constant 0 : i32
    return %c0_i32, %c0_i32_0 : i32, i32
  }
  func.func @transform_3(%arg0: i32) -> (i32, i32) {
    %c0_i32 = arith.constant 0 : i32
    %c0_i32_0 = arith.constant 0 : i32
    %c0_i32_1 = arith.constant 0 : i32
    return %c0_i32, %c0_i32_0 : i32, i32
  }
  func.func @transform_4(%arg0: i32) -> (i32, i32) {
    %c0_i32 = arith.constant 0 : i32
    %c0_i32_0 = arith.constant 0 : i32
    %c0_i32_1 = arith.constant 0 : i32
    return %c0_i32, %c0_i32_0 : i32, i32
  }
  func.func @transform_5(%arg0: i32) -> (i32, i32) {
    %c0_i32 = arith.constant 0 : i32
    %c0_i32_0 = arith.constant 0 : i32
    %c0_i32_1 = arith.constant 0 : i32
    return %c0_i32, %c0_i32_0 : i32, i32
  }
  func.func @transform_6(%arg0: i32) -> (i32, i32) {
    %c0_i32 = arith.constant 0 : i32
    %c0_i32_0 = arith.constant 0 : i32
    %c0_i32_1 = arith.constant 0 : i32
    return %c0_i32, %c0_i32_0 : i32, i32
  }
  func.func @transform_7(%arg0: i32) -> (i32, i32) {
    %c0_i32 = arith.constant 0 : i32
    %c0_i32_0 = arith.constant 0 : i32
    return %arg0, %c0_i32 : i32, i32
  }
}

</mosaic_0001>

<llo_original>
// kernel: tpu_custom_call.1
$region0: #{tpu_custom_call.1}
  #allocation0 [shape = 'u32[]', space=smem, size = 0x4, offset = 0x4, fixed_abs, tag = 'smem constant byte address 0x4 - core index']
  #allocation1 [shape = 'u32[144,128]{1,0:T(1,128)}', space=vmem, size = 0x12000, scoped, tag = 'internal scratch']
  %s0 = inlined_call_operand.vmem [shape: f32[2,32], index: 0, kind: input, shape index: {}]
  %s1 = inlined_call_operand.vmem [shape: f32[32,256], index: 1, kind: input, shape index: {}]
  %s2 = inlined_call_operand.vmem [shape: f32[1,256], index: 2, kind: input, shape index: {}]
  %s3 = inlined_call_operand.vmem [shape: f32[256,1024], index: 3, kind: input, shape index: {}]
  %s4 = inlined_call_operand.vmem [shape: f32[1,1024], index: 4, kind: input, shape index: {}]
  %s5 = inlined_call_operand.vmem [shape: f32[1024,160], index: 5, kind: input, shape index: {}]
  %s6 = inlined_call_operand.vmem [shape: f32[1,160], index: 6, kind: input, shape index: {}]
  %s7 = inlined_call_operand.hbm [shape: f32[2,160], index: 7, kind: output, shape index: {}]
  %s8 = sld [smem:[#allocation0]]
  $region38: #{tpu_custom_call.1} parent=0
    _
  %s10 = ssub.s32 1, %s8
  %s11 = scalar_select 0, %s10, %s8
  $region1: #{tpu_custom_call.1} parent=0
    #allocation2 [shape = 'u8[2048]{0}', space=vmem, size = 0x800, scoped, tag = 'output window, operand 0, single buffered']
    #allocation3 [shape = 's32[1]{0}', space=sflag, size = 0x4, scoped, tag = 'scoped memory for tpu_custom_call.1']
    %12 = vsyncpa [#allocation3], 0
    // Predicated region
    $region2: #{tpu_custom_call.1} parent=1 // pred_check
      _
    $region3: #{tpu_custom_call.1} parent=1 // pred_check_branch
      %14 = sbr.rel (0) target = $region5
    $region4: #{tpu_custom_call.1} parent=1 // pred_region
      _
    $region5: #{tpu_custom_call.1} parent=1 // pred_fallthru
      _
    // Predicated region
    $region6: #{tpu_custom_call.1} parent=1 // pred_check
      _
    $region7: #{tpu_custom_call.1} parent=1 // pred_check_branch
      %16 = sbr.rel (0) target = $region9
    $region8: #{tpu_custom_call.1} parent=1 // pred_region
      _
    $region9: #{tpu_custom_call.1} parent=1 // pred_fallthru
      _
    // Predicated region
    $region10: #{tpu_custom_call.1} parent=1 // pred_check
      _
    $region11: #{tpu_custom_call.1} parent=1 // pred_check_branch
      %18 = sbr.rel (0) target = $region13
    $region12: #{tpu_custom_call.1} parent=1 // pred_region
      _
    $region13: #{tpu_custom_call.1} parent=1 // pred_fallthru
      _
    // Predicated region
    $region14: #{tpu_custom_call.1} parent=1 // pred_check
      _
    $region15: #{tpu_custom_call.1} parent=1 // pred_check_branch
      %20 = sbr.rel (0) target = $region17
    $region16: #{tpu_custom_call.1} parent=1 // pred_region
      _
    $region17: #{tpu_custom_call.1} parent=1 // pred_fallthru
      _
    // Predicated region
    $region18: #{tpu_custom_call.1} parent=1 // pred_check
      _
    $region19: #{tpu_custom_call.1} parent=1 // pred_check_branch
      %22 = sbr.rel (0) target = $region21
    $region20: #{tpu_custom_call.1} parent=1 // pred_region
      _
    $region21: #{tpu_custom_call.1} parent=1 // pred_fallthru
      _
    // Predicated region
    $region22: #{tpu_custom_call.1} parent=1 // pred_check
      _
    $region23: #{tpu_custom_call.1} parent=1 // pred_check_branch
      %24 = sbr.rel (0) target = $region25
    $region24: #{tpu_custom_call.1} parent=1 // pred_region
      _
    $region25: #{tpu_custom_call.1} parent=1 // pred_fallthru
      _
    // Predicated region
    $region26: #{tpu_custom_call.1} parent=1 // pred_check
      _
    $region27: #{tpu_custom_call.1} parent=1 // pred_check_branch
      %26 = sbr.rel (0) target = $region29
    $region28: #{tpu_custom_call.1} parent=1 // pred_region
      _
    $region29: #{tpu_custom_call.1} parent=1 // pred_fallthru
      _
    %v27 = vld [vmem:[%s0] sm:$0x3]
    %v28 = vld [vmem:[%s1] sm:$0xff]
    %v29 = vld [vmem:[%s1 + $0x8] sm:$0xff]
    %v30 = vld [vmem:[%s1 + $0x10] sm:$0xff]
    %v31 = vld [vmem:[%s1 + $0x18] sm:$0xff]
    %v32 = vld [vmem:[%s1 + $0x20] sm:$0xff]
    %v33 = vld [vmem:[%s1 + $0x28] sm:$0xff]
    %v34 = vld [vmem:[%s1 + $0x30] sm:$0xff]
    %v35 = vld [vmem:[%s1 + $0x38] sm:$0xff]
    %v36 = vld [vmem:[%s2] sm:$0x3]
    %v38 = vlaneseq
    %v39 = vshrl.u32 %v38, 7
    %v40 = vsub.s32 0, %v39
    %v41 = vrot.slane %v36, %v40
    %v42 = vlaneseq
    %v43 = vshrl.u32 %v42, 7
    %v44 = vsub.s32 1, %v43
    %v45 = vrot.slane %v36, %v44
    %vm48 = vcmask 261120
    %v50 = vsel %vm48, %v27, 0
    %52 = vmatprep.subr.mxu0 0.0
    %53 = vmatpush1.msra.mxu0 0.0
    %54 = vmatprep.subr.mxu0 0.0
    %55 = vmatpush1.msra.mxu0 0.0
    %56 = vmatprep.subr.mxu0 0.0
    %57 = vmatpush1.msra.mxu0 0.0
    %58 = vmatprep.subr.mxu0 0.0
    %59 = vmatpush1.msra.mxu0 0.0
    %60 = vmatprep.subr.mxu0 0.0
    %61 = vmatpush1.msra.mxu0 0.0
    %62 = vmatprep.subr.mxu0 0.0
    %63 = vmatpush1.msra.mxu0 0.0
    %64 = vmatprep.subr.mxu0 0.0
    %65 = vmatpush1.msra.mxu0 0.0
    %66 = vmatprep.subr.mxu0 0.0
    %67 = vmatpush1.msra.mxu0 0.0
    %68 = vmatprep.subr.mxu0 0.0
    %69 = vmatpush1.msra.mxu0 0.0
    %70 = vmatprep.subr.mxu0 0.0
    %71 = vmatpush1.msra.mxu0 0.0
    %72 = vmatprep.subr.mxu0 0.0
    %73 = vmatpush1.msra.mxu0 0.0
    %74 = vmatprep.subr.mxu0 0.0
    %75 = vmatpush1.msra.mxu0 0.0
    %76 = vmatprep.subr.mxu0 %v35
    %77 = vmatpush1.msra.mxu0 %v34
    %78 = vmatprep.subr.mxu0 %v33
    %79 = vmatpush1.msra.mxu0 %v32
    %80 = vmatprep.subr.mxu0 %v31
    %81 = vmatpush1.msra.mxu0 %v30
    %82 = vmatprep.subr.mxu0 %v29
    %83 = vmatpush1.msra.mxu0 %v28
    %84 = vmatprep.subr.mxu0 0.0
    %85 = vmatpush2.msra.mxu0 0.0
    %86 = vmatprep.subr.mxu0 0.0
    %87 = vmatpush2.msra.mxu0 0.0
    %88 = vmatprep.subr.mxu0 0.0
    %89 = vmatpush2.msra.mxu0 0.0
    %90 = vmatprep.subr.mxu0 0.0
    %91 = vmatpush2.msra.mxu0 0.0
    %92 = vmatprep.subr.mxu0 0.0
    %93 = vmatpush2.msra.mxu0 0.0
    %94 = vmatprep.subr.mxu0 0.0
    %95 = vmatpush2.msra.mxu0 0.0
    %96 = vmatprep.subr.mxu0 0.0
    %97 = vmatpush2.msra.mxu0 0.0
    %98 = vmatprep.subr.mxu0 0.0
    %99 = vmatpush2.msra.mxu0 0.0
    %100 = vmatprep.subr.mxu0 0.0
    %101 = vmatpush2.msra.mxu0 0.0
    %102 = vmatprep.subr.mxu0 0.0
    %103 = vmatpush2.msra.mxu0 0.0
    %104 = vmatprep.subr.mxu0 0.0
    %105 = vmatpush2.msra.mxu0 0.0
    %106 = vmatprep.subr.mxu0 0.0
    %107 = vmatpush2.msra.mxu0 0.0
    %108 = vmatprep.subr.mxu0 0.0
    %109 = vmatpush2.msra.mxu0 0.0
    %110 = vmatprep.subr.mxu0 0.0
    %111 = vmatpush2.msra.mxu0 0.0
    %112 = vmatprep.subr.mxu0 0.0
    %113 = vmatpush2.msra.mxu0 0.0
    %114 = vmatprep.subr.mxu0 0.0
    %115 = vmatpush2.msra.mxu0 0.0
    %116 = vmatprep.mubr.f32.mxu0 0.0
    %117 = vmatmul.mubr.f32.gmra.mxu0 %v50
    %v118 = vpop.f32.mrf.mxu0
    %v119 = vadd.f32 %v41, %v118
    %v120 = vpop.f32.mrf.mxu0
    %v121 = vadd.f32 %v45, %v120
    %122 = vdwg.mxu0
    %vm123 = vcmp.gt.f32.partialorder %v119, 0.0
    %vm124 = vcmp.gt.f32.partialorder %v121, 0.0
    %v125 = vmin.f32 %v119, 0.0
    %v126 = vmin.f32 %v121, 0.0
    %v127 = vmul.f32 %v125, 1.442695
    %v128 = vpow.pop %v127
    %v129 = vmul.f32 %v126, 1.442695
    %v130 = vpow.pop %v129
    %v131 = vsub.f32 %v128, 1.0
    %v132 = vsub.f32 %v130, 1.0
    %v133 = vsel %vm123, %v119, %v131
    %v134 = vsel %vm124, %v121, %v132
    %v135 = vld [vmem:[%s3] sm:$0xff]
    %v136 = vld [vmem:[%s3 + $0x8] sm:$0xff]
    %v137 = vld [vmem:[%s3 + $0x10] sm:$0xff]
    %v138 = vld [vmem:[%s3 + $0x18] sm:$0xff]
    %v139 = vld [vmem:[%s3 + $0x20] sm:$0xff]
    %v140 = vld [vmem:[%s3 + $0x28] sm:$0xff]
    %v141 = vld [vmem:[%s3 + $0x30] sm:$0xff]
    %v142 = vld [vmem:[%s3 + $0x38] sm:$0xff]
    %v143 = vld [vmem:[%s3 + $0x40] sm:$0xff]
    %v144 = vld [vmem:[%s3 + $0x48] sm:$0xff]
    %v145 = vld [vmem:[%s3 + $0x50] sm:$0xff]
    %v146 = vld [vmem:[%s3 + $0x58] sm:$0xff]
    %v147 = vld [vmem:[%s3 + $0x60] sm:$0xff]
    %v148 = vld [vmem:[%s3 + $0x68] sm:$0xff]
    %v149 = vld [vmem:[%s3 + $0x70] sm:$0xff]
    %v150 = vld [vmem:[%s3 + $0x78] sm:$0xff]
    %v151 = vld [vmem:[%s3 + $0x80] sm:$0xff]
    %v152 = vld [vmem:[%s3 + $0x88] sm:$0xff]
    %v153 = vld [vmem:[%s3 + $0x90] sm:$0xff]
    %v154 = vld [vmem:[%s3 + $0x98] sm:$0xff]
    %v155 = vld [vmem:[%s3 + $0xa0] sm:$0xff]
    %v156 = vld [vmem:[%s3 + $0xa8] sm:$0xff]
    %v157 = vld [vmem:[%s3 + $0xb0] sm:$0xff]
    %v158 = vld [vmem:[%s3 + $0xb8] sm:$0xff]
    %v159 = vld [vmem:[%s3 + $0xc0] sm:$0xff]
    %v160 = vld [vmem:[%s3 + $0xc8] sm:$0xff]
    %v161 = vld [vmem:[%s3 + $0xd0] sm:$0xff]
    %v162 = vld [vmem:[%s3 + $0xd8] sm:$0xff]
    %v163 = vld [vmem:[%s3 + $0xe0] sm:$0xff]
    %v164 = vld [vmem:[%s3 + $0xe8] sm:$0xff]
    %v165 = vld [vmem:[%s3 + $0xf0] sm:$0xff]
    %v166 = vld [vmem:[%s3 + $0xf8] sm:$0xff]
    %v167 = vld [vmem:[%s3 + $0x100] sm:$0xff]
    %v168 = vld [vmem:[%s3 + $0x108] sm:$0xff]
    %v169 = vld [vmem:[%s3 + $0x110] sm:$0xff]
    %v170 = vld [vmem:[%s3 + $0x118] sm:$0xff]
    %v171 = vld [vmem:[%s3 + $0x120] sm:$0xff]
    %v172 = vld [vmem:[%s3 + $0x128] sm:$0xff]
    %v173 = vld [vmem:[%s3 + $0x130] sm:$0xff]
    %v174 = vld [vmem:[%s3 + $0x138] sm:$0xff]
    %v175 = vld [vmem:[%s3 + $0x140] sm:$0xff]
    %v176 = vld [vmem:[%s3 + $0x148] sm:$0xff]
    %v177 = vld [vmem:[%s3 + $0x150] sm:$0xff]
    %v178 = vld [vmem:[%s3 + $0x158] sm:$0xff]
    %v179 = vld [vmem:[%s3 + $0x160] sm:$0xff]
    %v180 = vld [vmem:[%s3 + $0x168] sm:$0xff]
    %v181 = vld [vmem:[%s3 + $0x170] sm:$0xff]
    %v182 = vld [vmem:[%s3 + $0x178] sm:$0xff]
    %v183 = vld [vmem:[%s3 + $0x180] sm:$0xff]
    %v184 = vld [vmem:[%s3 + $0x188] sm:$0xff]
    %v185 = vld [vmem:[%s3 + $0x190] sm:$0xff]
    %v186 = vld [vmem:[%s3 + $0x198] sm:$0xff]
    %v187 = vld [vmem:[%s3 + $0x1a0] sm:$0xff]
    %v188 = vld [vmem:[%s3 + $0x1a8] sm:$0xff]
    %v189 = vld [vmem:[%s3 + $0x1b0] sm:$0xff]
    %v190 = vld [vmem:[%s3 + $0x1b8] sm:$0xff]
    %v191 = vld [vmem:[%s3 + $0x1c0] sm:$0xff]
    %v192 = vld [vmem:[%s3 + $0x1c8] sm:$0xff]
    %v193 = vld [vmem:[%s3 + $0x1d0] sm:$0xff]
    %v194 = vld [vmem:[%s3 + $0x1d8] sm:$0xff]
    %v195 = vld [vmem:[%s3 + $0x1e0] sm:$0xff]
    %v196 = vld [vmem:[%s3 + $0x1e8] sm:$0xff]
    %v197 = vld [vmem:[%s3 + $0x1f0] sm:$0xff]
    %v198 = vld [vmem:[%s3 + $0x1f8] sm:$0xff]
    %v199 = vld [vmem:[%s3 + $0x200] sm:$0xff]
    %v200 = vld [vmem:[%s3 + $0x208] sm:$0xff]
    %v201 = vld [vmem:[%s3 + $0x210] sm:$0xff]
    %v202 = vld [vmem:[%s3 + $0x218] sm:$0xff]
    %v203 = vld [vmem:[%s3 + $0x220] sm:$0xff]
    %v204 = vld [vmem:[%s3 + $0x228] sm:$0xff]
    %v205 = vld [vmem:[%s3 + $0x230] sm:$0xff]
    %v206 = vld [vmem:[%s3 + $0x238] sm:$0xff]
    %v207 = vld [vmem:[%s3 + $0x240] sm:$0xff]
    %v208 = vld [vmem:[%s3 + $0x248] sm:$0xff]
    %v209 = vld [vmem:[%s3 + $0x250] sm:$0xff]
    %v210 = vld [vmem:[%s3 + $0x258] sm:$0xff]
    %v211 = vld [vmem:[%s3 + $0x260] sm:$0xff]
    %v212 = vld [vmem:[%s3 + $0x268] sm:$0xff]
    %v213 = vld [vmem:[%s3 + $0x270] sm:$0xff]
    %v214 = vld [vmem:[%s3 + $0x278] sm:$0xff]
    %v215 = vld [vmem:[%s3 + $0x280] sm:$0xff]
    %v216 = vld [vmem:[%s3 + $0x288] sm:$0xff]
    %v217 = vld [vmem:[%s3 + $0x290] sm:$0xff]
    %v218 = vld [vmem:[%s3 + $0x298] sm:$0xff]
    %v219 = vld [vmem:[%s3 + $0x2a0] sm:$0xff]
    %v220 = vld [vmem:[%s3 + $0x2a8] sm:$0xff]
    %v221 = vld [vmem:[%s3 + $0x2b0] sm:$0xff]
    %v222 = vld [vmem:[%s3 + $0x2b8] sm:$0xff]
    %v223 = vld [vmem:[%s3 + $0x2c0] sm:$0xff]
    %v224 = vld [vmem:[%s3 + $0x2c8] sm:$0xff]
    %v225 = vld [vmem:[%s3 + $0x2d0] sm:$0xff]
    %v226 = vld [vmem:[%s3 + $0x2d8] sm:$0xff]
    %v227 = vld [vmem:[%s3 + $0x2e0] sm:$0xff]
    %v228 = vld [vmem:[%s3 + $0x2e8] sm:$0xff]
    %v229 = vld [vmem:[%s3 + $0x2f0] sm:$0xff]
    %v230 = vld [vmem:[%s3 + $0x2f8] sm:$0xff]
    %v231 = vld [vmem:[%s3 + $0x300] sm:$0xff]
    %v232 = vld [vmem:[%s3 + $0x308] sm:$0xff]
    %v233 = vld [vmem:[%s3 + $0x310] sm:$0xff]
    %v234 = vld [vmem:[%s3 + $0x318] sm:$0xff]
    %v235 = vld [vmem:[%s3 + $0x320] sm:$0xff]
    %v236 = vld [vmem:[%s3 + $0x328] sm:$0xff]
    %v237 = vld [vmem:[%s3 + $0x330] sm:$0xff]
    %v238 = vld [vmem:[%s3 + $0x338] sm:$0xff]
    %v239 = vld [vmem:[%s3 + $0x340] sm:$0xff]
    %v240 = vld [vmem:[%s3 + $0x348] sm:$0xff]
    %v241 = vld [vmem:[%s3 + $0x350] sm:$0xff]
    %v242 = vld [vmem:[%s3 + $0x358] sm:$0xff]
    %v243 = vld [vmem:[%s3 + $0x360] sm:$0xff]
    %v244 = vld [vmem:[%s3 + $0x368] sm:$0xff]
    %v245 = vld [vmem:[%s3 + $0x370] sm:$0xff]
    %v246 = vld [vmem:[%s3 + $0x378] sm:$0xff]
    %v247 = vld [vmem:[%s3 + $0x380] sm:$0xff]
    %v248 = vld [vmem:[%s3 + $0x388] sm:$0xff]
    %v249 = vld [vmem:[%s3 + $0x390] sm:$0xff]
    %v250 = vld [vmem:[%s3 + $0x398] sm:$0xff]
    %v251 = vld [vmem:[%s3 + $0x3a0] sm:$0xff]
    %v252 = vld [vmem:[%s3 + $0x3a8] sm:$0xff]
    %v253 = vld [vmem:[%s3 + $0x3b0] sm:$0xff]
    %v254 = vld [vmem:[%s3 + $0x3b8] sm:$0xff]
    %v255 = vld [vmem:[%s3 + $0x3c0] sm:$0xff]
    %v256 = vld [vmem:[%s3 + $0x3c8] sm:$0xff]
    %v257 = vld [vmem:[%s3 + $0x3d0] sm:$0xff]
    %v258 = vld [vmem:[%s3 + $0x3d8] sm:$0xff]
    %v259 = vld [vmem:[%s3 + $0x3e0] sm:$0xff]
    %v260 = vld [vmem:[%s3 + $0x3e8] sm:$0xff]
    %v261 = vld [vmem:[%s3 + $0x3f0] sm:$0xff]
    %v262 = vld [vmem:[%s3 + $0x3f8] sm:$0xff]
    %v263 = vld [vmem:[%s3 + $0x400] sm:$0xff]
    %v264 = vld [vmem:[%s3 + $0x408] sm:$0xff]
    %v265 = vld [vmem:[%s3 + $0x410] sm:$0xff]
    %v266 = vld [vmem:[%s3 + $0x418] sm:$0xff]
    %v267 = vld [vmem:[%s3 + $0x420] sm:$0xff]
    %v268 = vld [vmem:[%s3 + $0x428] sm:$0xff]
    %v269 = vld [vmem:[%s3 + $0x430] sm:$0xff]
    %v270 = vld [vmem:[%s3 + $0x438] sm:$0xff]
    %v271 = vld [vmem:[%s3 + $0x440] sm:$0xff]
    %v272 = vld [vmem:[%s3 + $0x448] sm:$0xff]
    %v273 = vld [vmem:[%s3 + $0x450] sm:$0xff]
    %v274 = vld [vmem:[%s3 + $0x458] sm:$0xff]
    %v275 = vld [vmem:[%s3 + $0x460] sm:$0xff]
    %v276 = vld [vmem:[%s3 + $0x468] sm:$0xff]
    %v277 = vld [vmem:[%s3 + $0x470] sm:$0xff]
    %v278 = vld [vmem:[%s3 + $0x478] sm:$0xff]
    %v279 = vld [vmem:[%s3 + $0x480] sm:$0xff]
    %v280 = vld [vmem:[%s3 + $0x488] sm:$0xff]
    %v281 = vld [vmem:[%s3 + $0x490] sm:$0xff]
    %v282 = vld [vmem:[%s3 + $0x498] sm:$0xff]
    %v283 = vld [vmem:[%s3 + $0x4a0] sm:$0xff]
    %v284 = vld [vmem:[%s3 + $0x4a8] sm:$0xff]
    %v285 = vld [vmem:[%s3 + $0x4b0] sm:$0xff]
    %v286 = vld [vmem:[%s3 + $0x4b8] sm:$0xff]
    %v287 = vld [vmem:[%s3 + $0x4c0] sm:$0xff]
    %v288 = vld [vmem:[%s3 + $0x4c8] sm:$0xff]
    %v289 = vld [vmem:[%s3 + $0x4d0] sm:$0xff]
    %v290 = vld [vmem:[%s3 + $0x4d8] sm:$0xff]
    %v291 = vld [vmem:[%s3 + $0x4e0] sm:$0xff]
    %v292 = vld [vmem:[%s3 + $0x4e8] sm:$0xff]
    %v293 = vld [vmem:[%s3 + $0x4f0] sm:$0xff]
    %v294 = vld [vmem:[%s3 + $0x4f8] sm:$0xff]
    %v295 = vld [vmem:[%s3 + $0x500] sm:$0xff]
    %v296 = vld [vmem:[%s3 + $0x508] sm:$0xff]
    %v297 = vld [vmem:[%s3 + $0x510] sm:$0xff]
    %v298 = vld [vmem:[%s3 + $0x518] sm:$0xff]
    %v299 = vld [vmem:[%s3 + $0x520] sm:$0xff]
    %v300 = vld [vmem:[%s3 + $0x528] sm:$0xff]
    %v301 = vld [vmem:[%s3 + $0x530] sm:$0xff]
    %v302 = vld [vmem:[%s3 + $0x538] sm:$0xff]
    %v303 = vld [vmem:[%s3 + $0x540] sm:$0xff]
    %v304 = vld [vmem:[%s3 + $0x548] sm:$0xff]
    %v305 = vld [vmem:[%s3 + $0x550] sm:$0xff]
    %v306 = vld [vmem:[%s3 + $0x558] sm:$0xff]
    %v307 = vld [vmem:[%s3 + $0x560] sm:$0xff]
    %v308 = vld [vmem:[%s3 + $0x568] sm:$0xff]
    %v309 = vld [vmem:[%s3 + $0x570] sm:$0xff]
    %v310 = vld [vmem:[%s3 + $0x578] sm:$0xff]
    %v311 = vld [vmem:[%s3 + $0x580] sm:$0xff]
    %v312 = vld [vmem:[%s3 + $0x588] sm:$0xff]
    %v313 = vld [vmem:[%s3 + $0x590] sm:$0xff]
    %v314 = vld [vmem:[%s3 + $0x598] sm:$0xff]
    %v315 = vld [vmem:[%s3 + $0x5a0] sm:$0xff]
    %v316 = vld [vmem:[%s3 + $0x5a8] sm:$0xff]
    %v317 = vld [vmem:[%s3 + $0x5b0] sm:$0xff]
    %v318 = vld [vmem:[%s3 + $0x5b8] sm:$0xff]
    %v319 = vld [vmem:[%s3 + $0x5c0] sm:$0xff]
    %v320 = vld [vmem:[%s3 + $0x5c8] sm:$0xff]
    %v321 = vld [vmem:[%s3 + $0x5d0] sm:$0xff]
    %v322 = vld [vmem:[%s3 + $0x5d8] sm:$0xff]
    %v323 = vld [vmem:[%s3 + $0x5e0] sm:$0xff]
    %v324 = vld [vmem:[%s3 + $0x5e8] sm:$0xff]
    %v325 = vld [vmem:[%s3 + $0x5f0] sm:$0xff]
    %v326 = vld [vmem:[%s3 + $0x5f8] sm:$0xff]
    %v327 = vld [vmem:[%s3 + $0x600] sm:$0xff]
    %v328 = vld [vmem:[%s3 + $0x608] sm:$0xff]
    %v329 = vld [vmem:[%s3 + $0x610] sm:$0xff]
    %v330 = vld [vmem:[%s3 + $0x618] sm:$0xff]
    %v331 = vld [vmem:[%s3 + $0x620] sm:$0xff]
    %v332 = vld [vmem:[%s3 + $0x628] sm:$0xff]
    %v333 = vld [vmem:[%s3 + $0x630] sm:$0xff]
    %v334 = vld [vmem:[%s3 + $0x638] sm:$0xff]
    %v335 = vld [vmem:[%s3 + $0x640] sm:$0xff]
    %v336 = vld [vmem:[%s3 + $0x648] sm:$0xff]
    %v337 = vld [vmem:[%s3 + $0x650] sm:$0xff]
    %v338 = vld [vmem:[%s3 + $0x658] sm:$0xff]
    %v339 = vld [vmem:[%s3 + $0x660] sm:$0xff]
    %v340 = vld [vmem:[%s3 + $0x668] sm:$0xff]
    %v341 = vld [vmem:[%s3 + $0x670] sm:$0xff]
    %v342 = vld [vmem:[%s3 + $0x678] sm:$0xff]
    %v343 = vld [vmem:[%s3 + $0x680] sm:$0xff]
    %v344 = vld [vmem:[%s3 + $0x688] sm:$0xff]
    %v345 = vld [vmem:[%s3 + $0x690] sm:$0xff]
    %v346 = vld [vmem:[%s3 + $0x698] sm:$0xff]
    %v347 = vld [vmem:[%s3 + $0x6a0] sm:$0xff]
    %v348 = vld [vmem:[%s3 + $0x6a8] sm:$0xff]
    %v349 = vld [vmem:[%s3 + $0x6b0] sm:$0xff]
    %v350 = vld [vmem:[%s3 + $0x6b8] sm:$0xff]
    %v351 = vld [vmem:[%s3 + $0x6c0] sm:$0xff]
    %v352 = vld [vmem:[%s3 + $0x6c8] sm:$0xff]
    %v353 = vld [vmem:[%s3 + $0x6d0] sm:$0xff]
    %v354 = vld [vmem:[%s3 + $0x6d8] sm:$0xff]
    %v355 = vld [vmem:[%s3 + $0x6e0] sm:$0xff]
    %v356 = vld [vmem:[%s3 + $0x6e8] sm:$0xff]
    %v357 = vld [vmem:[%s3 + $0x6f0] sm:$0xff]
    %v358 = vld [vmem:[%s3 + $0x6f8] sm:$0xff]
    %v359 = vld [vmem:[%s3 + $0x700] sm:$0xff]
    %v360 = vld [vmem:[%s3 + $0x708] sm:$0xff]
    %v361 = vld [vmem:[%s3 + $0x710] sm:$0xff]
    %v362 = vld [vmem:[%s3 + $0x718] sm:$0xff]
    %v363 = vld [vmem:[%s3 + $0x720] sm:$0xff]
    %v364 = vld [vmem:[%s3 + $0x728] sm:$0xff]
    %v365 = vld [vmem:[%s3 + $0x730] sm:$0xff]
    %v366 = vld [vmem:[%s3 + $0x738] sm:$0xff]
    %v367 = vld [vmem:[%s3 + $0x740] sm:$0xff]
    %v368 = vld [vmem:[%s3 + $0x748] sm:$0xff]
    %v369 = vld [vmem:[%s3 + $0x750] sm:$0xff]
    %v370 = vld [vmem:[%s3 + $0x758] sm:$0xff]
    %v371 = vld [vmem:[%s3 + $0x760] sm:$0xff]
    %v372 = vld [vmem:[%s3 + $0x768] sm:$0xff]
    %v373 = vld [vmem:[%s3 + $0x770] sm:$0xff]
    %v374 = vld [vmem:[%s3 + $0x778] sm:$0xff]
    %v375 = vld [vmem:[%s3 + $0x780] sm:$0xff]
    %v376 = vld [vmem:[%s3 + $0x788] sm:$0xff]
    %v377 = vld [vmem:[%s3 + $0x790] sm:$0xff]
    %v378 = vld [vmem:[%s3 + $0x798] sm:$0xff]
    %v379 = vld [vmem:[%s3 + $0x7a0] sm:$0xff]
    %v380 = vld [vmem:[%s3 + $0x7a8] sm:$0xff]
    %v381 = vld [vmem:[%s3 + $0x7b0] sm:$0xff]
    %v382 = vld [vmem:[%s3 + $0x7b8] sm:$0xff]
    %v383 = vld [vmem:[%s3 + $0x7c0] sm:$0xff]
    %v384 = vld [vmem:[%s3 + $0x7c8] sm:$0xff]
    %v385 = vld [vmem:[%s3 + $0x7d0] sm:$0xff]
    %v386 = vld [vmem:[%s3 + $0x7d8] sm:$0xff]
    %v387 = vld [vmem:[%s3 + $0x7e0] sm:$0xff]
    %v388 = vld [vmem:[%s3 + $0x7e8] sm:$0xff]
    %v389 = vld [vmem:[%s3 + $0x7f0] sm:$0xff]
    %v390 = vld [vmem:[%s3 + $0x7f8] sm:$0xff]
    %v391 = vld [vmem:[%s4] sm:$0xff]
    %v393 = vlaneseq
    %v394 = vshrl.u32 %v393, 7
    %v395 = vsub.s32 0, %v394
    %v396 = vrot.slane %v391, %v395
    %v397 = vlaneseq
    %v398 = vshrl.u32 %v397, 7
    %v399 = vsub.s32 1, %v398
    %v400 = vrot.slane %v391, %v399
    %v401 = vlaneseq
    %v402 = vshrl.u32 %v401, 7
    %v403 = vsub.s32 2, %v402
    %v404 = vrot.slane %v391, %v403
    %v405 = vlaneseq
    %v406 = vshrl.u32 %v405, 7
    %v407 = vsub.s32 3, %v406
    %v408 = vrot.slane %v391, %v407
    %v409 = vlaneseq
    %v410 = vshrl.u32 %v409, 7
    %v411 = vsub.s32 4, %v410
    %v412 = vrot.slane %v391, %v411
    %v413 = vlaneseq
    %v414 = vshrl.u32 %v413, 7
    %v415 = vsub.s32 5, %v414
    %v416 = vrot.slane %v391, %v415
    %v417 = vlaneseq
    %v418 = vshrl.u32 %v417, 7
    %v419 = vsub.s32 6, %v418
    %v420 = vrot.slane %v391, %v419
    %v421 = vlaneseq
    %v422 = vshrl.u32 %v421, 7
    %v423 = vsub.s32 7, %v422
    %v424 = vrot.slane %v391, %v423
    %433 = vmatprep.subr.mxu0 %v256
    %434 = vmatpush1.msra.mxu0 %v255
    %435 = vmatprep.subr.mxu0 %v248
    %436 = vmatpush1.msra.mxu0 %v247
    %437 = vmatprep.subr.mxu0 %v240
    %438 = vmatpush1.msra.mxu0 %v239
    %439 = vmatprep.subr.mxu0 %v232
    %440 = vmatpush1.msra.mxu0 %v231
    %441 = vmatprep.subr.mxu0 %v224
    %442 = vmatpush1.msra.mxu0 %v223
    %443 = vmatprep.subr.mxu0 %v216
    %444 = vmatpush1.msra.mxu0 %v215
    %445 = vmatprep.subr.mxu0 %v208
    %446 = vmatpush1.msra.mxu0 %v207
    %447 = vmatprep.subr.mxu0 %v200
    %448 = vmatpush1.msra.mxu0 %v199
    %449 = vmatprep.subr.mxu0 %v192
    %450 = vmatpush1.msra.mxu0 %v191
    %451 = vmatprep.subr.mxu0 %v184
    %452 = vmatpush1.msra.mxu0 %v183
    %453 = vmatprep.subr.mxu0 %v176
    %454 = vmatpush1.msra.mxu0 %v175
    %455 = vmatprep.subr.mxu0 %v168
    %456 = vmatpush1.msra.mxu0 %v167
    %457 = vmatprep.subr.mxu0 %v160
    %458 = vmatpush1.msra.mxu0 %v159
    %459 = vmatprep.subr.mxu0 %v152
    %460 = vmatpush1.msra.mxu0 %v151
    %461 = vmatprep.subr.mxu0 %v144
    %462 = vmatpush1.msra.mxu0 %v143
    %463 = vmatprep.subr.mxu0 %v136
    %464 = vmatpush1.msra.mxu0 %v135
    %465 = vmatprep.subr.mxu0 %v384
    %466 = vmatpush2.msra.mxu0 %v383
    %467 = vmatprep.subr.mxu0 %v376
    %468 = vmatpush2.msra.mxu0 %v375
    %469 = vmatprep.subr.mxu0 %v368
    %470 = vmatpush2.msra.mxu0 %v367
    %471 = vmatprep.subr.mxu0 %v360
    %472 = vmatpush2.msra.mxu0 %v359
    %473 = vmatprep.subr.mxu0 %v352
    %474 = vmatpush2.msra.mxu0 %v351
    %475 = vmatprep.subr.mxu0 %v344
    %476 = vmatpush2.msra.mxu0 %v343
    %477 = vmatprep.subr.mxu0 %v336
    %478 = vmatpush2.msra.mxu0 %v335
    %479 = vmatprep.subr.mxu0 %v328
    %480 = vmatpush2.msra.mxu0 %v327
    %481 = vmatprep.subr.mxu0 %v320
    %482 = vmatpush2.msra.mxu0 %v319
    %483 = vmatprep.subr.mxu0 %v312
    %484 = vmatpush2.msra.mxu0 %v311
    %485 = vmatprep.subr.mxu0 %v304
    %486 = vmatpush2.msra.mxu0 %v303
    %487 = vmatprep.subr.mxu0 %v296
    %488 = vmatpush2.msra.mxu0 %v295
    %489 = vmatprep.subr.mxu0 %v288
    %490 = vmatpush2.msra.mxu0 %v287
    %491 = vmatprep.subr.mxu0 %v280
    %492 = vmatpush2.msra.mxu0 %v279
    %493 = vmatprep.subr.mxu0 %v272
    %494 = vmatpush2.msra.mxu0 %v271
    %495 = vmatprep.subr.mxu0 %v264
    %496 = vmatpush2.msra.mxu0 %v263
    %497 = vmatprep.mubr.f32.mxu0 %v134
    %498 = vmatmul.mubr.f32.gmra.mxu0 %v133
    %v499 = vpop.f32.mrf.mxu0
    %v500 = vadd.f32 %v396, %v499
    %v501 = vpop.f32.mrf.mxu0
    %v502 = vadd.f32 %v400, %v501
    %503 = vdwg.mxu0
    %504 = vmatprep.subr.mxu0 %v258
    %505 = vmatpush1.msra.mxu0 %v257
    %506 = vmatprep.subr.mxu0 %v250
    %507 = vmatpush1.msra.mxu0 %v249
    %508 = vmatprep.subr.mxu0 %v242
    %509 = vmatpush1.msra.mxu0 %v241
    %510 = vmatprep.subr.mxu0 %v234
    %511 = vmatpush1.msra.mxu0 %v233
    %512 = vmatprep.subr.mxu0 %v226
    %513 = vmatpush1.msra.mxu0 %v225
    %514 = vmatprep.subr.mxu0 %v218
    %515 = vmatpush1.msra.mxu0 %v217
    %516 = vmatprep.subr.mxu0 %v210
    %517 = vmatpush1.msra.mxu0 %v209
    %518 = vmatprep.subr.mxu0 %v202
    %519 = vmatpush1.msra.mxu0 %v201
    %520 = vmatprep.subr.mxu0 %v194
    %521 = vmatpush1.msra.mxu0 %v193
    %522 = vmatprep.subr.mxu0 %v186
    %523 = vmatpush1.msra.mxu0 %v185
    %524 = vmatprep.subr.mxu0 %v178
    %525 = vmatpush1.msra.mxu0 %v177
    %526 = vmatprep.subr.mxu0 %v170
    %527 = vmatpush1.msra.mxu0 %v169
    %528 = vmatprep.subr.mxu0 %v162
    %529 = vmatpush1.msra.mxu0 %v161
    %530 = vmatprep.subr.mxu0 %v154
    %531 = vmatpush1.msra.mxu0 %v153
    %532 = vmatprep.subr.mxu0 %v146
    %533 = vmatpush1.msra.mxu0 %v145
    %534 = vmatprep.subr.mxu0 %v138
    %535 = vmatpush1.msra.mxu0 %v137
    %536 = vmatprep.subr.mxu0 %v386
    %537 = vmatpush2.msra.mxu0 %v385
    %538 = vmatprep.subr.mxu0 %v378
    %539 = vmatpush2.msra.mxu0 %v377
    %540 = vmatprep.subr.mxu0 %v370
    %541 = vmatpush2.msra.mxu0 %v369
    %542 = vmatprep.subr.mxu0 %v362
    %543 = vmatpush2.msra.mxu0 %v361
    %544 = vmatprep.subr.mxu0 %v354
    %545 = vmatpush2.msra.mxu0 %v353
    %546 = vmatprep.subr.mxu0 %v346
    %547 = vmatpush2.msra.mxu0 %v345
    %548 = vmatprep.subr.mxu0 %v338
    %549 = vmatpush2.msra.mxu0 %v337
    %550 = vmatprep.subr.mxu0 %v330
    %551 = vmatpush2.msra.mxu0 %v329
    %552 = vmatprep.subr.mxu0 %v322
    %553 = vmatpush2.msra.mxu0 %v321
    %554 = vmatprep.subr.mxu0 %v314
    %555 = vmatpush2.msra.mxu0 %v313
    %556 = vmatprep.subr.mxu0 %v306
    %557 = vmatpush2.msra.mxu0 %v305
    %558 = vmatprep.subr.mxu0 %v298
    %559 = vmatpush2.msra.mxu0 %v297
    %560 = vmatprep.subr.mxu0 %v290
    %561 = vmatpush2.msra.mxu0 %v289
    %562 = vmatprep.subr.mxu0 %v282
    %563 = vmatpush2.msra.mxu0 %v281
    %564 = vmatprep.subr.mxu0 %v274
    %565 = vmatpush2.msra.mxu0 %v273
    %566 = vmatprep.subr.mxu0 %v266
    %567 = vmatpush2.msra.mxu0 %v265
    %568 = vmatprep.mubr.f32.mxu0 %v134
    %569 = vmatmul.mubr.f32.gmra.mxu0 %v133
    %v570 = vpop.f32.mrf.mxu0
    %v571 = vadd.f32 %v404, %v570
    %v572 = vpop.f32.mrf.mxu0
    %v573 = vadd.f32 %v408, %v572
    %574 = vdwg.mxu0
    %575 = vmatprep.subr.mxu0 %v260
    %576 = vmatpush1.msra.mxu0 %v259
    %577 = vmatprep.subr.mxu0 %v252
    %578 = vmatpush1.msra.mxu0 %v251
    %579 = vmatprep.subr.mxu0 %v244
    %580 = vmatpush1.msra.mxu0 %v243
    %581 = vmatprep.subr.mxu0 %v236
    %582 = vmatpush1.msra.mxu0 %v235
    %583 = vmatprep.subr.mxu0 %v228
    %584 = vmatpush1.msra.mxu0 %v227
    %585 = vmatprep.subr.mxu0 %v220
    %586 = vmatpush1.msra.mxu0 %v219
    %587 = vmatprep.subr.mxu0 %v212
    %588 = vmatpush1.msra.mxu0 %v211
    %589 = vmatprep.subr.mxu0 %v204
    %590 = vmatpush1.msra.mxu0 %v203
    %591 = vmatprep.subr.mxu0 %v196
    %592 = vmatpush1.msra.mxu0 %v195
    %593 = vmatprep.subr.mxu0 %v188
    %594 = vmatpush1.msra.mxu0 %v187
    %595 = vmatprep.subr.mxu0 %v180
    %596 = vmatpush1.msra.mxu0 %v179
    %597 = vmatprep.subr.mxu0 %v172
    %598 = vmatpush1.msra.mxu0 %v171
    %599 = vmatprep.subr.mxu0 %v164
    %600 = vmatpush1.msra.mxu0 %v163
    %601 = vmatprep.subr.mxu0 %v156
    %602 = vmatpush1.msra.mxu0 %v155
    %603 = vmatprep.subr.mxu0 %v148
    %604 = vmatpush1.msra.mxu0 %v147
    %605 = vmatprep.subr.mxu0 %v140
    %606 = vmatpush1.msra.mxu0 %v139
    %607 = vmatprep.subr.mxu0 %v388
    %608 = vmatpush2.msra.mxu0 %v387
    %609 = vmatprep.subr.mxu0 %v380
    %610 = vmatpush2.msra.mxu0 %v379
    %611 = vmatprep.subr.mxu0 %v372
    %612 = vmatpush2.msra.mxu0 %v371
    %613 = vmatprep.subr.mxu0 %v364
    %614 = vmatpush2.msra.mxu0 %v363
    %615 = vmatprep.subr.mxu0 %v356
    %616 = vmatpush2.msra.mxu0 %v355
    %617 = vmatprep.subr.mxu0 %v348
    %618 = vmatpush2.msra.mxu0 %v347
    %619 = vmatprep.subr.mxu0 %v340
    %620 = vmatpush2.msra.mxu0 %v339
    %621 = vmatprep.subr.mxu0 %v332
    %622 = vmatpush2.msra.mxu0 %v331
    %623 = vmatprep.subr.mxu0 %v324
    %624 = vmatpush2.msra.mxu0 %v323
    %625 = vmatprep.subr.mxu0 %v316
    %626 = vmatpush2.msra.mxu0 %v315
    %627 = vmatprep.subr.mxu0 %v308
    %628 = vmatpush2.msra.mxu0 %v307
    %629 = vmatprep.subr.mxu0 %v300
    %630 = vmatpush2.msra.mxu0 %v299
    %631 = vmatprep.subr.mxu0 %v292
    %632 = vmatpush2.msra.mxu0 %v291
    %633 = vmatprep.subr.mxu0 %v284
    %634 = vmatpush2.msra.mxu0 %v283
    %635 = vmatprep.subr.mxu0 %v276
    %636 = vmatpush2.msra.mxu0 %v275
    %637 = vmatprep.subr.mxu0 %v268
    %638 = vmatpush2.msra.mxu0 %v267
    %639 = vmatprep.mubr.f32.mxu0 %v134
    %640 = vmatmul.mubr.f32.gmra.mxu0 %v133
    %v641 = vpop.f32.mrf.mxu0
    %v642 = vadd.f32 %v412, %v641
    %v643 = vpop.f32.mrf.mxu0
    %v644 = vadd.f32 %v416, %v643
    %645 = vdwg.mxu0
    %646 = vmatprep.subr.mxu0 %v262
    %647 = vmatpush1.msra.mxu0 %v261
    %648 = vmatprep.subr.mxu0 %v254
    %649 = vmatpush1.msra.mxu0 %v253
    %650 = vmatprep.subr.mxu0 %v246
    %651 = vmatpush1.msra.mxu0 %v245
    %652 = vmatprep.subr.mxu0 %v238
    %653 = vmatpush1.msra.mxu0 %v237
    %654 = vmatprep.subr.mxu0 %v230
    %655 = vmatpush1.msra.mxu0 %v229
    %656 = vmatprep.subr.mxu0 %v222
    %657 = vmatpush1.msra.mxu0 %v221
    %658 = vmatprep.subr.mxu0 %v214
    %659 = vmatpush1.msra.mxu0 %v213
    %660 = vmatprep.subr.mxu0 %v206
    %661 = vmatpush1.msra.mxu0 %v205
    %662 = vmatprep.subr.mxu0 %v198
    %663 = vmatpush1.msra.mxu0 %v197
    %664 = vmatprep.subr.mxu0 %v190
    %665 = vmatpush1.msra.mxu0 %v189
    %666 = vmatprep.subr.mxu0 %v182
    %667 = vmatpush1.msra.mxu0 %v181
    %668 = vmatprep.subr.mxu0 %v174
    %669 = vmatpush1.msra.mxu0 %v173
    %670 = vmatprep.subr.mxu0 %v166
    %671 = vmatpush1.msra.mxu0 %v165
    %672 = vmatprep.subr.mxu0 %v158
    %673 = vmatpush1.msra.mxu0 %v157
    %674 = vmatprep.subr.mxu0 %v150
    %675 = vmatpush1.msra.mxu0 %v149
    %676 = vmatprep.subr.mxu0 %v142
    %677 = vmatpush1.msra.mxu0 %v141
    %678 = vmatprep.subr.mxu0 %v390
    %679 = vmatpush2.msra.mxu0 %v389
    %680 = vmatprep.subr.mxu0 %v382
    %681 = vmatpush2.msra.mxu0 %v381
    %682 = vmatprep.subr.mxu0 %v374
    %683 = vmatpush2.msra.mxu0 %v373
    %684 = vmatprep.subr.mxu0 %v366
    %685 = vmatpush2.msra.mxu0 %v365
    %686 = vmatprep.subr.mxu0 %v358
    %687 = vmatpush2.msra.mxu0 %v357
    %688 = vmatprep.subr.mxu0 %v350
    %689 = vmatpush2.msra.mxu0 %v349
    %690 = vmatprep.subr.mxu0 %v342
    %691 = vmatpush2.msra.mxu0 %v341
    %692 = vmatprep.subr.mxu0 %v334
    %693 = vmatpush2.msra.mxu0 %v333
    %694 = vmatprep.subr.mxu0 %v326
    %695 = vmatpush2.msra.mxu0 %v325
    %696 = vmatprep.subr.mxu0 %v318
    %697 = vmatpush2.msra.mxu0 %v317
    %698 = vmatprep.subr.mxu0 %v310
    %699 = vmatpush2.msra.mxu0 %v309
    %700 = vmatprep.subr.mxu0 %v302
    %701 = vmatpush2.msra.mxu0 %v301
    %702 = vmatprep.subr.mxu0 %v294
    %703 = vmatpush2.msra.mxu0 %v293
    %704 = vmatprep.subr.mxu0 %v286
    %705 = vmatpush2.msra.mxu0 %v285
    %706 = vmatprep.subr.mxu0 %v278
    %707 = vmatpush2.msra.mxu0 %v277
    %708 = vmatprep.subr.mxu0 %v270
    %709 = vmatpush2.msra.mxu0 %v269
    %710 = vmatprep.mubr.f32.mxu0 %v134
    %711 = vmatmul.mubr.f32.gmra.mxu0 %v133
    %v712 = vpop.f32.mrf.mxu0
    %v713 = vadd.f32 %v420, %v712
    %v714 = vpop.f32.mrf.mxu0
    %v715 = vadd.f32 %v424, %v714
    %716 = vdwg.mxu0
    %vm717 = vcmp.gt.f32.partialorder %v500, 0.0
    %vm718 = vcmp.gt.f32.partialorder %v502, 0.0
    %vm719 = vcmp.gt.f32.partialorder %v571, 0.0
    %vm720 = vcmp.gt.f32.partialorder %v573, 0.0
    %vm721 = vcmp.gt.f32.partialorder %v642, 0.0
    %vm722 = vcmp.gt.f32.partialorder %v644, 0.0
    %vm723 = vcmp.gt.f32.partialorder %v713, 0.0
    %vm724 = vcmp.gt.f32.partialorder %v715, 0.0
    %v725 = vmin.f32 %v500, 0.0
    %v726 = vmin.f32 %v502, 0.0
    %v727 = vmin.f32 %v571, 0.0
    %v728 = vmin.f32 %v573, 0.0
    %v729 = vmin.f32 %v642, 0.0
    %v730 = vmin.f32 %v644, 0.0
    %v731 = vmin.f32 %v713, 0.0
    %v732 = vmin.f32 %v715, 0.0
    %v733 = vmul.f32 %v725, 1.442695
    %v734 = vpow.pop %v733
    %v735 = vmul.f32 %v726, 1.442695
    %v736 = vpow.pop %v735
    %v737 = vmul.f32 %v727, 1.442695
    %v738 = vpow.pop %v737
    %v739 = vmul.f32 %v728, 1.442695
    %v740 = vpow.pop %v739
    %v741 = vmul.f32 %v729, 1.442695
    %v742 = vpow.pop %v741
    %v743 = vmul.f32 %v730, 1.442695
    %v744 = vpow.pop %v743
    %v745 = vmul.f32 %v731, 1.442695
    %v746 = vpow.pop %v745
    %v747 = vmul.f32 %v732, 1.442695
    %v748 = vpow.pop %v747
    %v749 = vsub.f32 %v734, 1.0
    %v750 = vsub.f32 %v736, 1.0
    %v751 = vsub.f32 %v738, 1.0
    %v752 = vsub.f32 %v740, 1.0
    %v753 = vsub.f32 %v742, 1.0
    %v754 = vsub.f32 %v744, 1.0
    %v755 = vsub.f32 %v746, 1.0
    %v756 = vsub.f32 %v748, 1.0
    %v757 = vsel %vm717, %v500, %v749
    %v758 = vsel %vm718, %v502, %v750
    %v759 = vsel %vm719, %v571, %v751
    %v760 = vsel %vm720, %v573, %v752
    %v761 = vsel %vm721, %v642, %v753
    %v762 = vsel %vm722, %v644, %v754
    %v763 = vsel %vm723, %v713, %v755
    %v764 = vsel %vm724, %v715, %v756
    %v765 = vld [vmem:[%s5] sm:$0xff]
    %v766 = vld [vmem:[%s5 + $0x8] sm:$0xff]
    %v767 = vld [vmem:[%s5 + $0x10] sm:$0xff]
    %v768 = vld [vmem:[%s5 + $0x18] sm:$0xff]
    %v769 = vld [vmem:[%s5 + $0x20] sm:$0xff]
    %v770 = vld [vmem:[%s5 + $0x28] sm:$0xff]
    %v771 = vld [vmem:[%s5 + $0x30] sm:$0xff]
    %v772 = vld [vmem:[%s5 + $0x38] sm:$0xff]
    %v773 = vld [vmem:[%s5 + $0x40] sm:$0xff]
    %v774 = vld [vmem:[%s5 + $0x48] sm:$0xff]
    %v775 = vld [vmem:[%s5 + $0x50] sm:$0xff]
    %v776 = vld [vmem:[%s5 + $0x58] sm:$0xff]
    %v777 = vld [vmem:[%s5 + $0x60] sm:$0xff]
    %v778 = vld [vmem:[%s5 + $0x68] sm:$0xff]
    %v779 = vld [vmem:[%s5 + $0x70] sm:$0xff]
    %v780 = vld [vmem:[%s5 + $0x78] sm:$0xff]
    %v781 = vld [vmem:[%s5 + $0x80] sm:$0xff]
    %v782 = vld [vmem:[%s5 + $0x88] sm:$0xff]
    %v783 = vld [vmem:[%s5 + $0x90] sm:$0xff]
    %v784 = vld [vmem:[%s5 + $0x98] sm:$0xff]
    %v785 = vld [vmem:[%s5 + $0xa0] sm:$0xff]
    %v786 = vld [vmem:[%s5 + $0xa8] sm:$0xff]
    %v787 = vld [vmem:[%s5 + $0xb0] sm:$0xff]
    %v788 = vld [vmem:[%s5 + $0xb8] sm:$0xff]
    %v789 = vld [vmem:[%s5 + $0xc0] sm:$0xff]
    %v790 = vld [vmem:[%s5 + $0xc8] sm:$0xff]
    %v791 = vld [vmem:[%s5 + $0xd0] sm:$0xff]
    %v792 = vld [vmem:[%s5 + $0xd8] sm:$0xff]
    %v793 = vld [vmem:[%s5 + $0xe0] sm:$0xff]
    %v794 = vld [vmem:[%s5 + $0xe8] sm:$0xff]
    %v795 = vld [vmem:[%s5 + $0xf0] sm:$0xff]
    %v796 = vld [vmem:[%s5 + $0xf8] sm:$0xff]
    %v797 = vld [vmem:[%s5 + $0x100] sm:$0xff]
    %v798 = vld [vmem:[%s5 + $0x108] sm:$0xff]
    %v799 = vld [vmem:[%s5 + $0x110] sm:$0xff]
    %v800 = vld [vmem:[%s5 + $0x118] sm:$0xff]
    %v801 = vld [vmem:[%s5 + $0x120] sm:$0xff]
    %v802 = vld [vmem:[%s5 + $0x128] sm:$0xff]
    %v803 = vld [vmem:[%s5 + $0x130] sm:$0xff]
    %v804 = vld [vmem:[%s5 + $0x138] sm:$0xff]
    %v805 = vld [vmem:[%s5 + $0x140] sm:$0xff]
    %v806 = vld [vmem:[%s5 + $0x148] sm:$0xff]
    %v807 = vld [vmem:[%s5 + $0x150] sm:$0xff]
    %v808 = vld [vmem:[%s5 + $0x158] sm:$0xff]
    %v809 = vld [vmem:[%s5 + $0x160] sm:$0xff]
    %v810 = vld [vmem:[%s5 + $0x168] sm:$0xff]
    %v811 = vld [vmem:[%s5 + $0x170] sm:$0xff]
    %v812 = vld [vmem:[%s5 + $0x178] sm:$0xff]
    %v813 = vld [vmem:[%s5 + $0x180] sm:$0xff]
    %v814 = vld [vmem:[%s5 + $0x188] sm:$0xff]
    %v815 = vld [vmem:[%s5 + $0x190] sm:$0xff]
    %v816 = vld [vmem:[%s5 + $0x198] sm:$0xff]
    %v817 = vld [vmem:[%s5 + $0x1a0] sm:$0xff]
    %v818 = vld [vmem:[%s5 + $0x1a8] sm:$0xff]
    %v819 = vld [vmem:[%s5 + $0x1b0] sm:$0xff]
    %v820 = vld [vmem:[%s5 + $0x1b8] sm:$0xff]
    %v821 = vld [vmem:[%s5 + $0x1c0] sm:$0xff]
    %v822 = vld [vmem:[%s5 + $0x1c8] sm:$0xff]
    %v823 = vld [vmem:[%s5 + $0x1d0] sm:$0xff]
    %v824 = vld [vmem:[%s5 + $0x1d8] sm:$0xff]
    %v825 = vld [vmem:[%s5 + $0x1e0] sm:$0xff]
    %v826 = vld [vmem:[%s5 + $0x1e8] sm:$0xff]
    %v827 = vld [vmem:[%s5 + $0x1f0] sm:$0xff]
    %v828 = vld [vmem:[%s5 + $0x1f8] sm:$0xff]
    %v829 = vld [vmem:[%s5 + $0x200] sm:$0xff]
    %v830 = vld [vmem:[%s5 + $0x208] sm:$0xff]
    %v831 = vld [vmem:[%s5 + $0x210] sm:$0xff]
    %v832 = vld [vmem:[%s5 + $0x218] sm:$0xff]
    %v833 = vld [vmem:[%s5 + $0x220] sm:$0xff]
    %v834 = vld [vmem:[%s5 + $0x228] sm:$0xff]
    %v835 = vld [vmem:[%s5 + $0x230] sm:$0xff]
    %v836 = vld [vmem:[%s5 + $0x238] sm:$0xff]
    %v837 = vld [vmem:[%s5 + $0x240] sm:$0xff]
    %v838 = vld [vmem:[%s5 + $0x248] sm:$0xff]
    %v839 = vld [vmem:[%s5 + $0x250] sm:$0xff]
    %v840 = vld [vmem:[%s5 + $0x258] sm:$0xff]
    %v841 = vld [vmem:[%s5 + $0x260] sm:$0xff]
    %v842 = vld [vmem:[%s5 + $0x268] sm:$0xff]
    %v843 = vld [vmem:[%s5 + $0x270] sm:$0xff]
    %v844 = vld [vmem:[%s5 + $0x278] sm:$0xff]
    %v845 = vld [vmem:[%s5 + $0x280] sm:$0xff]
    %v846 = vld [vmem:[%s5 + $0x288] sm:$0xff]
    %v847 = vld [vmem:[%s5 + $0x290] sm:$0xff]
    %v848 = vld [vmem:[%s5 + $0x298] sm:$0xff]
    %v849 = vld [vmem:[%s5 + $0x2a0] sm:$0xff]
    %v850 = vld [vmem:[%s5 + $0x2a8] sm:$0xff]
    %v851 = vld [vmem:[%s5 + $0x2b0] sm:$0xff]
    %v852 = vld [vmem:[%s5 + $0x2b8] sm:$0xff]
    %v853 = vld [vmem:[%s5 + $0x2c0] sm:$0xff]
    %v854 = vld [vmem:[%s5 + $0x2c8] sm:$0xff]
    %v855 = vld [vmem:[%s5 + $0x2d0] sm:$0xff]
    %v856 = vld [vmem:[%s5 + $0x2d8] sm:$0xff]
    %v857 = vld [vmem:[%s5 + $0x2e0] sm:$0xff]
    %v858 = vld [vmem:[%s5 + $0x2e8] sm:$0xff]
    %v859 = vld [vmem:[%s5 + $0x2f0] sm:$0xff]
    %v860 = vld [vmem:[%s5 + $0x2f8] sm:$0xff]
    %v861 = vld [vmem:[%s5 + $0x300] sm:$0xff]
    %v862 = vld [vmem:[%s5 + $0x308] sm:$0xff]
    %v863 = vld [vmem:[%s5 + $0x310] sm:$0xff]
    %v864 = vld [vmem:[%s5 + $0x318] sm:$0xff]
    %v865 = vld [vmem:[%s5 + $0x320] sm:$0xff]
    %v866 = vld [vmem:[%s5 + $0x328] sm:$0xff]
    %v867 = vld [vmem:[%s5 + $0x330] sm:$0xff]
    %v868 = vld [vmem:[%s5 + $0x338] sm:$0xff]
    %v869 = vld [vmem:[%s5 + $0x340] sm:$0xff]
    %v870 = vld [vmem:[%s5 + $0x348] sm:$0xff]
    %v871 = vld [vmem:[%s5 + $0x350] sm:$0xff]
    %v872 = vld [vmem:[%s5 + $0x358] sm:$0xff]
    %v873 = vld [vmem:[%s5 + $0x360] sm:$0xff]
    %v874 = vld [vmem:[%s5 + $0x368] sm:$0xff]
    %v875 = vld [vmem:[%s5 + $0x370] sm:$0xff]
    %v876 = vld [vmem:[%s5 + $0x378] sm:$0xff]
    %v877 = vld [vmem:[%s5 + $0x380] sm:$0xff]
    %v878 = vld [vmem:[%s5 + $0x388] sm:$0xff]
    %v879 = vld [vmem:[%s5 + $0x390] sm:$0xff]
    %v880 = vld [vmem:[%s5 + $0x398] sm:$0xff]
    %v881 = vld [vmem:[%s5 + $0x3a0] sm:$0xff]
    %v882 = vld [vmem:[%s5 + $0x3a8] sm:$0xff]
    %v883 = vld [vmem:[%s5 + $0x3b0] sm:$0xff]
    %v884 = vld [vmem:[%s5 + $0x3b8] sm:$0xff]
    %v885 = vld [vmem:[%s5 + $0x3c0] sm:$0xff]
    %v886 = vld [vmem:[%s5 + $0x3c8] sm:$0xff]
    %v887 = vld [vmem:[%s5 + $0x3d0] sm:$0xff]
    %v888 = vld [vmem:[%s5 + $0x3d8] sm:$0xff]
    %v889 = vld [vmem:[%s5 + $0x3e0] sm:$0xff]
    %v890 = vld [vmem:[%s5 + $0x3e8] sm:$0xff]
    %v891 = vld [vmem:[%s5 + $0x3f0] sm:$0xff]
    %v892 = vld [vmem:[%s5 + $0x3f8] sm:$0xff]
    %v893 = vld [vmem:[%s5 + $0x400] sm:$0xff]
    %v894 = vld [vmem:[%s5 + $0x408] sm:$0xff]
    %v895 = vld [vmem:[%s5 + $0x410] sm:$0xff]
    %v896 = vld [vmem:[%s5 + $0x418] sm:$0xff]
    %v897 = vld [vmem:[%s5 + $0x420] sm:$0xff]
    %v898 = vld [vmem:[%s5 + $0x428] sm:$0xff]
    %v899 = vld [vmem:[%s5 + $0x430] sm:$0xff]
    %v900 = vld [vmem:[%s5 + $0x438] sm:$0xff]
    %v901 = vld [vmem:[%s5 + $0x440] sm:$0xff]
    %v902 = vld [vmem:[%s5 + $0x448] sm:$0xff]
    %v903 = vld [vmem:[%s5 + $0x450] sm:$0xff]
    %v904 = vld [vmem:[%s5 + $0x458] sm:$0xff]
    %v905 = vld [vmem:[%s5 + $0x460] sm:$0xff]
    %v906 = vld [vmem:[%s5 + $0x468] sm:$0xff]
    %v907 = vld [vmem:[%s5 + $0x470] sm:$0xff]
    %v908 = vld [vmem:[%s5 + $0x478] sm:$0xff]
    %v909 = vld [vmem:[%s5 + $0x480] sm:$0xff]
    %v910 = vld [vmem:[%s5 + $0x488] sm:$0xff]
    %v911 = vld [vmem:[%s5 + $0x490] sm:$0xff]
    %v912 = vld [vmem:[%s5 + $0x498] sm:$0xff]
    %v913 = vld [vmem:[%s5 + $0x4a0] sm:$0xff]
    %v914 = vld [vmem:[%s5 + $0x4a8] sm:$0xff]
    %v915 = vld [vmem:[%s5 + $0x4b0] sm:$0xff]
    %v916 = vld [vmem:[%s5 + $0x4b8] sm:$0xff]
    %v917 = vld [vmem:[%s5 + $0x4c0] sm:$0xff]
    %v918 = vld [vmem:[%s5 + $0x4c8] sm:$0xff]
    %v919 = vld [vmem:[%s5 + $0x4d0] sm:$0xff]
    %v920 = vld [vmem:[%s5 + $0x4d8] sm:$0xff]
    %v921 = vld [vmem:[%s5 + $0x4e0] sm:$0xff]
    %v922 = vld [vmem:[%s5 + $0x4e8] sm:$0xff]
    %v923 = vld [vmem:[%s5 + $0x4f0] sm:$0xff]
    %v924 = vld [vmem:[%s5 + $0x4f8] sm:$0xff]
    %v925 = vld [vmem:[%s5 + $0x500] sm:$0xff]
    %v926 = vld [vmem:[%s5 + $0x508] sm:$0xff]
    %v927 = vld [vmem:[%s5 + $0x510] sm:$0xff]
    %v928 = vld [vmem:[%s5 + $0x518] sm:$0xff]
    %v929 = vld [vmem:[%s5 + $0x520] sm:$0xff]
    %v930 = vld [vmem:[%s5 + $0x528] sm:$0xff]
    %v931 = vld [vmem:[%s5 + $0x530] sm:$0xff]
    %v932 = vld [vmem:[%s5 + $0x538] sm:$0xff]
    %v933 = vld [vmem:[%s5 + $0x540] sm:$0xff]
    %v934 = vld [vmem:[%s5 + $0x548] sm:$0xff]
    %v935 = vld [vmem:[%s5 + $0x550] sm:$0xff]
    %v936 = vld [vmem:[%s5 + $0x558] sm:$0xff]
    %v937 = vld [vmem:[%s5 + $0x560] sm:$0xff]
    %v938 = vld [vmem:[%s5 + $0x568] sm:$0xff]
    %v939 = vld [vmem:[%s5 + $0x570] sm:$0xff]
    %v940 = vld [vmem:[%s5 + $0x578] sm:$0xff]
    %v941 = vld [vmem:[%s5 + $0x580] sm:$0xff]
    %v942 = vld [vmem:[%s5 + $0x588] sm:$0xff]
    %v943 = vld [vmem:[%s5 + $0x590] sm:$0xff]
    %v944 = vld [vmem:[%s5 + $0x598] sm:$0xff]
    %v945 = vld [vmem:[%s5 + $0x5a0] sm:$0xff]
    %v946 = vld [vmem:[%s5 + $0x5a8] sm:$0xff]
    %v947 = vld [vmem:[%s5 + $0x5b0] sm:$0xff]
    %v948 = vld [vmem:[%s5 + $0x5b8] sm:$0xff]
    %v949 = vld [vmem:[%s5 + $0x5c0] sm:$0xff]
    %v950 = vld [vmem:[%s5 + $0x5c8] sm:$0xff]
    %v951 = vld [vmem:[%s5 + $0x5d0] sm:$0xff]
    %v952 = vld [vmem:[%s5 + $0x5d8] sm:$0xff]
    %v953 = vld [vmem:[%s5 + $0x5e0] sm:$0xff]
    %v954 = vld [vmem:[%s5 + $0x5e8] sm:$0xff]
    %v955 = vld [vmem:[%s5 + $0x5f0] sm:$0xff]
    %v956 = vld [vmem:[%s5 + $0x5f8] sm:$0xff]
    %v957 = vld [vmem:[%s5 + $0x600] sm:$0xff]
    %v958 = vld [vmem:[%s5 + $0x608] sm:$0xff]
    %v959 = vld [vmem:[%s5 + $0x610] sm:$0xff]
    %v960 = vld [vmem:[%s5 + $0x618] sm:$0xff]
    %v961 = vld [vmem:[%s5 + $0x620] sm:$0xff]
    %v962 = vld [vmem:[%s5 + $0x628] sm:$0xff]
    %v963 = vld [vmem:[%s5 + $0x630] sm:$0xff]
    %v964 = vld [vmem:[%s5 + $0x638] sm:$0xff]
    %v965 = vld [vmem:[%s5 + $0x640] sm:$0xff]
    %v966 = vld [vmem:[%s5 + $0x648] sm:$0xff]
    %v967 = vld [vmem:[%s5 + $0x650] sm:$0xff]
    %v968 = vld [vmem:[%s5 + $0x658] sm:$0xff]
    %v969 = vld [vmem:[%s5 + $0x660] sm:$0xff]
    %v970 = vld [vmem:[%s5 + $0x668] sm:$0xff]
    %v971 = vld [vmem:[%s5 + $0x670] sm:$0xff]
    %v972 = vld [vmem:[%s5 + $0x678] sm:$0xff]
    %v973 = vld [vmem:[%s5 + $0x680] sm:$0xff]
    %v974 = vld [vmem:[%s5 + $0x688] sm:$0xff]
    %v975 = vld [vmem:[%s5 + $0x690] sm:$0xff]
    %v976 = vld [vmem:[%s5 + $0x698] sm:$0xff]
    %v977 = vld [vmem:[%s5 + $0x6a0] sm:$0xff]
    %v978 = vld [vmem:[%s5 + $0x6a8] sm:$0xff]
    %v979 = vld [vmem:[%s5 + $0x6b0] sm:$0xff]
    %v980 = vld [vmem:[%s5 + $0x6b8] sm:$0xff]
    %v981 = vld [vmem:[%s5 + $0x6c0] sm:$0xff]
    %v982 = vld [vmem:[%s5 + $0x6c8] sm:$0xff]
    %v983 = vld [vmem:[%s5 + $0x6d0] sm:$0xff]
    %v984 = vld [vmem:[%s5 + $0x6d8] sm:$0xff]
    %v985 = vld [vmem:[%s5 + $0x6e0] sm:$0xff]
    %v986 = vld [vmem:[%s5 + $0x6e8] sm:$0xff]
    %v987 = vld [vmem:[%s5 + $0x6f0] sm:$0xff]
    %v988 = vld [vmem:[%s5 + $0x6f8] sm:$0xff]
    %v989 = vld [vmem:[%s5 + $0x700] sm:$0xff]
    %v990 = vld [vmem:[%s5 + $0x708] sm:$0xff]
    %v991 = vld [vmem:[%s5 + $0x710] sm:$0xff]
    %v992 = vld [vmem:[%s5 + $0x718] sm:$0xff]
    %v993 = vld [vmem:[%s5 + $0x720] sm:$0xff]
    %v994 = vld [vmem:[%s5 + $0x728] sm:$0xff]
    %v995 = vld [vmem:[%s5 + $0x730] sm:$0xff]
    %v996 = vld [vmem:[%s5 + $0x738] sm:$0xff]
    %v997 = vld [vmem:[%s5 + $0x740] sm:$0xff]
    %v998 = vld [vmem:[%s5 + $0x748] sm:$0xff]
    %v999 = vld [vmem:[%s5 + $0x750] sm:$0xff]
    %v1000 = vld [vmem:[%s5 + $0x758] sm:$0xff]
    %v1001 = vld [vmem:[%s5 + $0x760] sm:$0xff]
    %v1002 = vld [vmem:[%s5 + $0x768] sm:$0xff]
    %v1003 = vld [vmem:[%s5 + $0x770] sm:$0xff]
    %v1004 = vld [vmem:[%s5 + $0x778] sm:$0xff]
    %v1005 = vld [vmem:[%s5 + $0x780] sm:$0xff]
    %v1006 = vld [vmem:[%s5 + $0x788] sm:$0xff]
    %v1007 = vld [vmem:[%s5 + $0x790] sm:$0xff]
    %v1008 = vld [vmem:[%s5 + $0x798] sm:$0xff]
    %v1009 = vld [vmem:[%s5 + $0x7a0] sm:$0xff]
    %v1010 = vld [vmem:[%s5 + $0x7a8] sm:$0xff]
    %v1011 = vld [vmem:[%s5 + $0x7b0] sm:$0xff]
    %v1012 = vld [vmem:[%s5 + $0x7b8] sm:$0xff]
    %v1013 = vld [vmem:[%s5 + $0x7c0] sm:$0xff]
    %v1014 = vld [vmem:[%s5 + $0x7c8] sm:$0xff]
    %v1015 = vld [vmem:[%s5 + $0x7d0] sm:$0xff]
    %v1016 = vld [vmem:[%s5 + $0x7d8] sm:$0xff]
    %v1017 = vld [vmem:[%s5 + $0x7e0] sm:$0xff]
    %v1018 = vld [vmem:[%s5 + $0x7e8] sm:$0xff]
    %v1019 = vld [vmem:[%s5 + $0x7f0] sm:$0xff]
    %v1020 = vld [vmem:[%s5 + $0x7f8] sm:$0xff]
    %v1021 = vld [vmem:[%s6] sm:$0x3]
    %v1023 = vlaneseq
    %v1024 = vshrl.u32 %v1023, 7
    %v1025 = vsub.s32 0, %v1024
    %v1026 = vrot.slane %v1021, %v1025
    %v1027 = vlaneseq
    %v1028 = vshrl.u32 %v1027, 7
    %v1029 = vsub.s32 1, %v1028
    %v1030 = vrot.slane %v1021, %v1029
    %1033 = vmatprep.subr.mxu0 %v796
    %1034 = vmatpush1.msra.mxu0 %v795
    %1035 = vmatprep.subr.mxu0 %v794
    %1036 = vmatpush1.msra.mxu0 %v793
    %1037 = vmatprep.subr.mxu0 %v792
    %1038 = vmatpush1.msra.mxu0 %v791
    %1039 = vmatprep.subr.mxu0 %v790
    %1040 = vmatpush1.msra.mxu0 %v789
    %1041 = vmatprep.subr.mxu0 %v788
    %1042 = vmatpush1.msra.mxu0 %v787
    %1043 = vmatprep.subr.mxu0 %v786
    %1044 = vmatpush1.msra.mxu0 %v785
    %1045 = vmatprep.subr.mxu0 %v784
    %1046 = vmatpush1.msra.mxu0 %v783
    %1047 = vmatprep.subr.mxu0 %v782
    %1048 = vmatpush1.msra.mxu0 %v781
    %1049 = vmatprep.subr.mxu0 %v780
    %1050 = vmatpush1.msra.mxu0 %v779
    %1051 = vmatprep.subr.mxu0 %v778
    %1052 = vmatpush1.msra.mxu0 %v777
    %1053 = vmatprep.subr.mxu0 %v776
    %1054 = vmatpush1.msra.mxu0 %v775
    %1055 = vmatprep.subr.mxu0 %v774
    %1056 = vmatpush1.msra.mxu0 %v773
    %1057 = vmatprep.subr.mxu0 %v772
    %1058 = vmatpush1.msra.mxu0 %v771
    %1059 = vmatprep.subr.mxu0 %v770
    %1060 = vmatpush1.msra.mxu0 %v769
    %1061 = vmatprep.subr.mxu0 %v768
    %1062 = vmatpush1.msra.mxu0 %v767
    %1063 = vmatprep.subr.mxu0 %v766
    %1064 = vmatpush1.msra.mxu0 %v765
    %1065 = vmatprep.subr.mxu0 %v828
    %1066 = vmatpush2.msra.mxu0 %v827
    %1067 = vmatprep.subr.mxu0 %v826
    %1068 = vmatpush2.msra.mxu0 %v825
    %1069 = vmatprep.subr.mxu0 %v824
    %1070 = vmatpush2.msra.mxu0 %v823
    %1071 = vmatprep.subr.mxu0 %v822
    %1072 = vmatpush2.msra.mxu0 %v821
    %1073 = vmatprep.subr.mxu0 %v820
    %1074 = vmatpush2.msra.mxu0 %v819
    %1075 = vmatprep.subr.mxu0 %v818
    %1076 = vmatpush2.msra.mxu0 %v817
    %1077 = vmatprep.subr.mxu0 %v816
    %1078 = vmatpush2.msra.mxu0 %v815
    %1079 = vmatprep.subr.mxu0 %v814
    %1080 = vmatpush2.msra.mxu0 %v813
    %1081 = vmatprep.subr.mxu0 %v812
    %1082 = vmatpush2.msra.mxu0 %v811
    %1083 = vmatprep.subr.mxu0 %v810
    %1084 = vmatpush2.msra.mxu0 %v809
    %1085 = vmatprep.subr.mxu0 %v808
    %1086 = vmatpush2.msra.mxu0 %v807
    %1087 = vmatprep.subr.mxu0 %v806
    %1088 = vmatpush2.msra.mxu0 %v805
    %1089 = vmatprep.subr.mxu0 %v804
    %1090 = vmatpush2.msra.mxu0 %v803
    %1091 = vmatprep.subr.mxu0 %v802
    %1092 = vmatpush2.msra.mxu0 %v801
    %1093 = vmatprep.subr.mxu0 %v800
    %1094 = vmatpush2.msra.mxu0 %v799
    %1095 = vmatprep.subr.mxu0 %v798
    %1096 = vmatpush2.msra.mxu0 %v797
    %1097 = vmatprep.mubr.f32.mxu0 %v758
    %1098 = vmatmul.mubr.f32.gmra.mxu0 %v757
    %v1099 = vpop.f32.mrf.mxu0
    %v1100 = vadd.f32 %v1026, %v1099
    %v1101 = vpop.f32.mrf.mxu0
    %v1102 = vadd.f32 %v1030, %v1101
    %1103 = vdwg.mxu0
    %1104 = vmatprep.subr.mxu0 %v860
    %1105 = vmatpush1.msra.mxu0 %v859
    %1106 = vmatprep.subr.mxu0 %v858
    %1107 = vmatpush1.msra.mxu0 %v857
    %1108 = vmatprep.subr.mxu0 %v856
    %1109 = vmatpush1.msra.mxu0 %v855
    %1110 = vmatprep.subr.mxu0 %v854
    %1111 = vmatpush1.msra.mxu0 %v853
    %1112 = vmatprep.subr.mxu0 %v852
    %1113 = vmatpush1.msra.mxu0 %v851
    %1114 = vmatprep.subr.mxu0 %v850
    %1115 = vmatpush1.msra.mxu0 %v849
    %1116 = vmatprep.subr.mxu0 %v848
    %1117 = vmatpush1.msra.mxu0 %v847
    %1118 = vmatprep.subr.mxu0 %v846
    %1119 = vmatpush1.msra.mxu0 %v845
    %1120 = vmatprep.subr.mxu0 %v844
    %1121 = vmatpush1.msra.mxu0 %v843
    %1122 = vmatprep.subr.mxu0 %v842
    %1123 = vmatpush1.msra.mxu0 %v841
    %1124 = vmatprep.subr.mxu0 %v840
    %1125 = vmatpush1.msra.mxu0 %v839
    %1126 = vmatprep.subr.mxu0 %v838
    %1127 = vmatpush1.msra.mxu0 %v837
    %1128 = vmatprep.subr.mxu0 %v836
    %1129 = vmatpush1.msra.mxu0 %v835
    %1130 = vmatprep.subr.mxu0 %v834
    %1131 = vmatpush1.msra.mxu0 %v833
    %1132 = vmatprep.subr.mxu0 %v832
    %1133 = vmatpush1.msra.mxu0 %v831
    %1134 = vmatprep.subr.mxu0 %v830
    %1135 = vmatpush1.msra.mxu0 %v829
    %1136 = vmatprep.subr.mxu0 %v892
    %1137 = vmatpush2.msra.mxu0 %v891
    %1138 = vmatprep.subr.mxu0 %v890
    %1139 = vmatpush2.msra.mxu0 %v889
    %1140 = vmatprep.subr.mxu0 %v888
    %1141 = vmatpush2.msra.mxu0 %v887
    %1142 = vmatprep.subr.mxu0 %v886
    %1143 = vmatpush2.msra.mxu0 %v885
    %1144 = vmatprep.subr.mxu0 %v884
    %1145 = vmatpush2.msra.mxu0 %v883
    %1146 = vmatprep.subr.mxu0 %v882
    %1147 = vmatpush2.msra.mxu0 %v881
    %1148 = vmatprep.subr.mxu0 %v880
    %1149 = vmatpush2.msra.mxu0 %v879
    %1150 = vmatprep.subr.mxu0 %v878
    %1151 = vmatpush2.msra.mxu0 %v877
    %1152 = vmatprep.subr.mxu0 %v876
    %1153 = vmatpush2.msra.mxu0 %v875
    %1154 = vmatprep.subr.mxu0 %v874
    %1155 = vmatpush2.msra.mxu0 %v873
    %1156 = vmatprep.subr.mxu0 %v872
    %1157 = vmatpush2.msra.mxu0 %v871
    %1158 = vmatprep.subr.mxu0 %v870
    %1159 = vmatpush2.msra.mxu0 %v869
    %1160 = vmatprep.subr.mxu0 %v868
    %1161 = vmatpush2.msra.mxu0 %v867
    %1162 = vmatprep.subr.mxu0 %v866
    %1163 = vmatpush2.msra.mxu0 %v865
    %1164 = vmatprep.subr.mxu0 %v864
    %1165 = vmatpush2.msra.mxu0 %v863
    %1166 = vmatprep.subr.mxu0 %v862
    %1167 = vmatpush2.msra.mxu0 %v861
    %1168 = vmatprep.mubr.f32.mxu0 %v760
    %1169 = vmatmul.mubr.f32.gmra.mxu0 %v759
    %v1170 = vpop.f32.mrf.mxu0
    %v1171 = vadd.f32 %v1100, %v1170
    %v1172 = vpop.f32.mrf.mxu0
    %v1173 = vadd.f32 %v1102, %v1172
    %1174 = vdwg.mxu0
    %1175 = vmatprep.subr.mxu0 %v924
    %1176 = vmatpush1.msra.mxu0 %v923
    %1177 = vmatprep.subr.mxu0 %v922
    %1178 = vmatpush1.msra.mxu0 %v921
    %1179 = vmatprep.subr.mxu0 %v920
    %1180 = vmatpush1.msra.mxu0 %v919
    %1181 = vmatprep.subr.mxu0 %v918
    %1182 = vmatpush1.msra.mxu0 %v917
    %1183 = vmatprep.subr.mxu0 %v916
    %1184 = vmatpush1.msra.mxu0 %v915
    %1185 = vmatprep.subr.mxu0 %v914
    %1186 = vmatpush1.msra.mxu0 %v913
    %1187 = vmatprep.subr.mxu0 %v912
    %1188 = vmatpush1.msra.mxu0 %v911
    %1189 = vmatprep.subr.mxu0 %v910
    %1190 = vmatpush1.msra.mxu0 %v909
    %1191 = vmatprep.subr.mxu0 %v908
    %1192 = vmatpush1.msra.mxu0 %v907
    %1193 = vmatprep.subr.mxu0 %v906
    %1194 = vmatpush1.msra.mxu0 %v905
    %1195 = vmatprep.subr.mxu0 %v904
    %1196 = vmatpush1.msra.mxu0 %v903
    %1197 = vmatprep.subr.mxu0 %v902
    %1198 = vmatpush1.msra.mxu0 %v901
    %1199 = vmatprep.subr.mxu0 %v900
    %1200 = vmatpush1.msra.mxu0 %v899
    %1201 = vmatprep.subr.mxu0 %v898
    %1202 = vmatpush1.msra.mxu0 %v897
    %1203 = vmatprep.subr.mxu0 %v896
    %1204 = vmatpush1.msra.mxu0 %v895
    %1205 = vmatprep.subr.mxu0 %v894
    %1206 = vmatpush1.msra.mxu0 %v893
    %1207 = vmatprep.subr.mxu0 %v956
    %1208 = vmatpush2.msra.mxu0 %v955
    %1209 = vmatprep.subr.mxu0 %v954
    %1210 = vmatpush2.msra.mxu0 %v953
    %1211 = vmatprep.subr.mxu0 %v952
    %1212 = vmatpush2.msra.mxu0 %v951
    %1213 = vmatprep.subr.mxu0 %v950
    %1214 = vmatpush2.msra.mxu0 %v949
    %1215 = vmatprep.subr.mxu0 %v948
    %1216 = vmatpush2.msra.mxu0 %v947
    %1217 = vmatprep.subr.mxu0 %v946
    %1218 = vmatpush2.msra.mxu0 %v945
    %1219 = vmatprep.subr.mxu0 %v944
    %1220 = vmatpush2.msra.mxu0 %v943
    %1221 = vmatprep.subr.mxu0 %v942
    %1222 = vmatpush2.msra.mxu0 %v941
    %1223 = vmatprep.subr.mxu0 %v940
    %1224 = vmatpush2.msra.mxu0 %v939
    %1225 = vmatprep.subr.mxu0 %v938
    %1226 = vmatpush2.msra.mxu0 %v937
    %1227 = vmatprep.subr.mxu0 %v936
    %1228 = vmatpush2.msra.mxu0 %v935
    %1229 = vmatprep.subr.mxu0 %v934
    %1230 = vmatpush2.msra.mxu0 %v933
    %1231 = vmatprep.subr.mxu0 %v932
    %1232 = vmatpush2.msra.mxu0 %v931
    %1233 = vmatprep.subr.mxu0 %v930
    %1234 = vmatpush2.msra.mxu0 %v929
    %1235 = vmatprep.subr.mxu0 %v928
    %1236 = vmatpush2.msra.mxu0 %v927
    %1237 = vmatprep.subr.mxu0 %v926
    %1238 = vmatpush2.msra.mxu0 %v925
    %1239 = vmatprep.mubr.f32.mxu0 %v762
    %1240 = vmatmul.mubr.f32.gmra.mxu0 %v761
    %v1241 = vpop.f32.mrf.mxu0
    %v1242 = vadd.f32 %v1171, %v1241
    %v1243 = vpop.f32.mrf.mxu0
    %v1244 = vadd.f32 %v1173, %v1243
    %1245 = vdwg.mxu0
    %1246 = vmatprep.subr.mxu0 %v988
    %1247 = vmatpush1.msra.mxu0 %v987
    %1248 = vmatprep.subr.mxu0 %v986
    %1249 = vmatpush1.msra.mxu0 %v985
    %1250 = vmatprep.subr.mxu0 %v984
    %1251 = vmatpush1.msra.mxu0 %v983
    %1252 = vmatprep.subr.mxu0 %v982
    %1253 = vmatpush1.msra.mxu0 %v981
    %1254 = vmatprep.subr.mxu0 %v980
    %1255 = vmatpush1.msra.mxu0 %v979
    %1256 = vmatprep.subr.mxu0 %v978
    %1257 = vmatpush1.msra.mxu0 %v977
    %1258 = vmatprep.subr.mxu0 %v976
    %1259 = vmatpush1.msra.mxu0 %v975
    %1260 = vmatprep.subr.mxu0 %v974
    %1261 = vmatpush1.msra.mxu0 %v973
    %1262 = vmatprep.subr.mxu0 %v972
    %1263 = vmatpush1.msra.mxu0 %v971
    %1264 = vmatprep.subr.mxu0 %v970
    %1265 = vmatpush1.msra.mxu0 %v969
    %1266 = vmatprep.subr.mxu0 %v968
    %1267 = vmatpush1.msra.mxu0 %v967
    %1268 = vmatprep.subr.mxu0 %v966
    %1269 = vmatpush1.msra.mxu0 %v965
    %1270 = vmatprep.subr.mxu0 %v964
    %1271 = vmatpush1.msra.mxu0 %v963
    %1272 = vmatprep.subr.mxu0 %v962
    %1273 = vmatpush1.msra.mxu0 %v961
    %1274 = vmatprep.subr.mxu0 %v960
    %1275 = vmatpush1.msra.mxu0 %v959
    %1276 = vmatprep.subr.mxu0 %v958
    %1277 = vmatpush1.msra.mxu0 %v957
    %1278 = vmatprep.subr.mxu0 %v1020
    %1279 = vmatpush2.msra.mxu0 %v1019
    %1280 = vmatprep.subr.mxu0 %v1018
    %1281 = vmatpush2.msra.mxu0 %v1017
    %1282 = vmatprep.subr.mxu0 %v1016
    %1283 = vmatpush2.msra.mxu0 %v1015
    %1284 = vmatprep.subr.mxu0 %v1014
    %1285 = vmatpush2.msra.mxu0 %v1013
    %1286 = vmatprep.subr.mxu0 %v1012
    %1287 = vmatpush2.msra.mxu0 %v1011
    %1288 = vmatprep.subr.mxu0 %v1010
    %1289 = vmatpush2.msra.mxu0 %v1009
    %1290 = vmatprep.subr.mxu0 %v1008
    %1291 = vmatpush2.msra.mxu0 %v1007
    %1292 = vmatprep.subr.mxu0 %v1006
    %1293 = vmatpush2.msra.mxu0 %v1005
    %1294 = vmatprep.subr.mxu0 %v1004
    %1295 = vmatpush2.msra.mxu0 %v1003
    %1296 = vmatprep.subr.mxu0 %v1002
    %1297 = vmatpush2.msra.mxu0 %v1001
    %1298 = vmatprep.subr.mxu0 %v1000
    %1299 = vmatpush2.msra.mxu0 %v999
    %1300 = vmatprep.subr.mxu0 %v998
    %1301 = vmatpush2.msra.mxu0 %v997
    %1302 = vmatprep.subr.mxu0 %v996
    %1303 = vmatpush2.msra.mxu0 %v995
    %1304 = vmatprep.subr.mxu0 %v994
    %1305 = vmatpush2.msra.mxu0 %v993
    %1306 = vmatprep.subr.mxu0 %v992
    %1307 = vmatpush2.msra.mxu0 %v991
    %1308 = vmatprep.subr.mxu0 %v990
    %1309 = vmatpush2.msra.mxu0 %v989
    %1310 = vmatprep.mubr.f32.mxu0 %v764
    %1311 = vmatmul.mubr.f32.gmra.mxu0 %v763
    %v1312 = vpop.f32.mrf.mxu0
    %v1313 = vadd.f32 %v1242, %v1312
    %v1314 = vpop.f32.mrf.mxu0
    %v1315 = vadd.f32 %v1244, %v1314
    %1316 = vdwg.mxu0
    %v1319 = vcombine.low %v1313, %v1315
    %v1321 = vunpack.c.l.s4 1983009808
    %v1322 = vunpack.c.0.s8 %v1321
    %v1323 = vlaneseq
    %v1324 = vshrl.u32 %v1323, 7
    %v1325 = vsub.s32 %v1322, %v1324
    %v1326 = vrot.slane %v1319, %v1325
    %vm1328 = vcmask 1041408
    %vm1329 = vcmask 257026
    %vm1330 = vmor %vm1329, %vm1328
    %1331 = vst.msk [vmem:[#allocation2] sm:$0xf] %vm1330, %v1326
    // Predicated region
    $region30: #{tpu_custom_call.1} parent=1 // pred_check
      _
    $region31: #{tpu_custom_call.1} parent=1 // pred_check_branch
      %1333 = sbr.rel (0) target = $region33
    $region32: #{tpu_custom_call.1} parent=1 // pred_region
      %s1335 = ssub.s32 64, 64
      %1336 = vsyncadd [#allocation3], %s1335
      %s1338 = sshll.u32 [#allocation2], 4
      %s1339 = int_to_ptr.vmem [resolvable:$true] %s1338
      %1341 = dma.vmem_to_hbm [thread:$0]  %s1339, 64, %s7, [#allocation3]
    $region33: #{tpu_custom_call.1} parent=1 // pred_fallthru
      _
    // Predicated region
    $region34: #{tpu_custom_call.1} parent=1 // pred_check
      _
    $region35: #{tpu_custom_call.1} parent=1 // pred_check_branch
      %1343 = sbr.rel (0) target = $region37
    $region36: #{tpu_custom_call.1} parent=1 // pred_region
      %1344 = dma.done [#allocation3], 64
    $region37: #{tpu_custom_call.1} parent=1 // pred_fallthru
      _
    %1345 = vsyncpa [#allocation3], 1

</llo_original>
